<compile_context>
chip_gen: v6e
topology: v6e:2x2x1
jax: 0.10.0
libtpu: 0.0.40
codegen_flags: <defaults>
</compile_context>

<pallas_src>
import functools

import jax
import jax.numpy as jnp
from jax.experimental import pallas as pl
from jax.experimental.pallas import tpu as pltpu


# ---------------------------------------------------------------------------
# Kernel
# ---------------------------------------------------------------------------
def _layer_norm(x, w, b, eps=1e-5):
    # f32 statistics; only MXU operands are cast to bf16.
    mu = jnp.mean(x, axis=-1, keepdims=True)
    var = jnp.mean(jnp.square(x - mu), axis=-1, keepdims=True)
    return (x - mu) * jax.lax.rsqrt(var + eps) * w + b


def _block_kernel(x_ref,
                  ln1w_ref, ln1b_ref,
                  wqkv_ref, wo_ref, bo_ref,
                  ln2w_ref, ln2b_ref,
                  w1_ref, b1_ref, w2_ref, b2_ref,
                  out_ref,
                  k_scr, v_scr, o_scr,
                  *, num_heads, q_tile):
    qi = pl.program_id(1)                      # query-tile index (sequential per batch element)
    _, _, emb = x_ref.shape
    hs = emb // num_heads
    scale = 1.0 / (hs ** 0.5)
    q_start = pl.multiple_of(qi * q_tile, q_tile)

    x_t = x_ref[0]                             # (TQ, E) f32 residual-stream tile

    # ---- LN1 + fused QKV projection (bf16 operands, f32 MXU accumulation) ----
    h1 = _layer_norm(x_t, ln1w_ref[0], ln1b_ref[0]).astype(jnp.bfloat16)
    qkv = jnp.dot(h1, wqkv_ref[...], preferred_element_type=jnp.float32)   # (TQ, 3E) f32

    def to_heads(z):   # (TQ, E) -> (H, TQ, hs) via static lane slices + stack (no cross-lane reshape)
        return jnp.stack([z[:, hd * hs:(hd + 1) * hs] for hd in range(num_heads)], axis=0)

    q_h = to_heads(qkv[:, :emb] * scale).astype(jnp.bfloat16)              # (H, TQ, hs)
    k_h = to_heads(qkv[:, emb:2 * emb]).astype(jnp.bfloat16)
    v_h = to_heads(qkv[:, 2 * emb:]).astype(jnp.bfloat16)

    # Append this tile's K/V to the per-batch head-major VMEM cache.  Grid axis 1 is "arbitrary"
    # (sequential) with batch as the outer axis, so blocks 0..qi-1 were written at earlier steps of
    # this batch element -> each row of K/V is projected exactly once.  Do NOT reorder the grid or
    # mark the q-tile axis parallel.
    k_scr[:, pl.ds(q_start, q_tile), :] = k_h
    v_scr[:, pl.ds(q_start, q_tile), :] = v_h

    # ---- flash-style causal attention, head-batched, state carried in registers ----
    def online_update(s, v_blk, m, l, acc):
        m_new = jnp.maximum(m, jnp.max(s, axis=-1, keepdims=True))
        alpha = jnp.exp(m - m_new)
        p = jnp.exp(s - m_new)
        l_new = alpha * l + jnp.sum(p, axis=-1, keepdims=True)
        pv = jnp.einsum('hqk,hkd->hqd', p.astype(jnp.bfloat16), v_blk,
                        preferred_element_type=jnp.float32)                # (H, TQ, hs)
        return m_new, l_new, alpha * acc + pv

    def off_diag_body(kv, carry):
        # Fully-unmasked KV blocks strictly below the diagonal: no iota / compare / select.
        m, l, acc = carry
        koff = pl.multiple_of(kv * q_tile, q_tile)
        k_blk = k_scr[:, pl.ds(koff, q_tile), :]                           # (H, TK, hs) bf16
        v_blk = v_scr[:, pl.ds(koff, q_tile), :]
        s = jnp.einsum('hqd,hkd->hqk', q_h, k_blk,
                       preferred_element_type=jnp.float32)                 # (H, TQ, TK)
        return online_update(s, v_blk, m, l, acc)

    m0 = jnp.full((num_heads, q_tile, 1), -jnp.inf, jnp.float32)
    l0 = jnp.zeros((num_heads, q_tile, 1), jnp.float32)
    acc0 = jnp.zeros((num_heads, q_tile, hs), jnp.float32)
    m, l, acc = jax.lax.fori_loop(0, qi, off_diag_body, (m0, l0, acc0))

    # Diagonal block: masked, uses the freshly projected k_h/v_h (no scratch re-read).
    row = jax.lax.broadcasted_iota(jnp.int32, (q_tile, q_tile), 0)
    col = jax.lax.broadcasted_iota(jnp.int32, (q_tile, q_tile), 1)
    s_diag = jnp.einsum('hqd,hkd->hqk', q_h, k_h, preferred_element_type=jnp.float32)
    s_diag = jnp.where((col <= row)[None, :, :], s_diag, -1e30)
    m, l, acc = online_update(s_diag, v_h, m, l, acc)

    # ---- per-head normalize into a bf16 staging slab, then ONE full-depth output projection ----
    for hd in range(num_heads):
        o_scr[:, hd * hs:(hd + 1) * hs] = (
            acc[hd] * pl.reciprocal(l[hd], approx=True)).astype(jnp.bfloat16)
    attn = jnp.dot(o_scr[...], wo_ref[...], preferred_element_type=jnp.float32)  # (TQ, E) f32
    # TODO(synk): attention/residual dropout omitted (eval mode -> identity).
    x1 = x_t + attn + bo_ref[0]

    # ---- x1 + FeedForward(LayerNorm2(x1)) on the same row tile ----
    # TODO(synk): for very large E on v7x, stream w1/w2 hidden-dim slices via emit_pipeline instead
    # of keeping the full FFN weights resident in VMEM.
    h2 = _layer_norm(x1, ln2w_ref[0], ln2b_ref[0]).astype(jnp.bfloat16)
    ff = jnp.dot(h2, w1_ref[...], preferred_element_type=jnp.float32) + b1_ref[0]
    ff = jnp.maximum(ff, 0.0).astype(jnp.bfloat16)     # ReLU, bf16 intermediate for 2nd matmul
    ff = jnp.dot(ff, w2_ref[...], preferred_element_type=jnp.float32) + b2_ref[0]
    out_ref[0] = x1 + ff


# ---------------------------------------------------------------------------
# Wrapper
# ---------------------------------------------------------------------------
def transformer_block(x, params, num_heads, q_tile=None):
    B, T, E = x.shape
    assert E % num_heads == 0, "embedding_size must be divisible by num_heads"
    hs = E // num_heads

    if q_tile is None:
        if T <= 256:
            q_tile = T
        elif T % 256 == 0:
            q_tile = 256          # fill the 256-deep/wide MXU on v6e/v7x
        elif T % 128 == 0:
            q_tile = 128
        else:
            q_tile = T
    assert T % q_tile == 0
    num_q_tiles = T // q_tile

    bf = jnp.bfloat16
    # Matmul weights cast to bf16 once host-side; wq/wk/wv fused into one (E, 3E) weight.
    w_qkv = jnp.concatenate([params["wq"], params["wk"], params["wv"]], axis=1).astype(bf)
    weights = [
        params["ln1_w"], params["ln1_b"],
        w_qkv, params["wo"].astype(bf), params["bo"],
        params["ln2_w"], params["ln2_b"],
        params["w1"].astype(bf), params["b1"],
        params["w2"].astype(bf), params["b2"],
    ]

    # Grid-invariant weights: whole-array VMEM operands (unblocked) -> single copy, no
    # double-buffered pipeline buffers wasting VMEM.
    weight_spec = pl.BlockSpec(memory_space=pltpu.MemorySpace.VMEM)

    grid_spec = pltpu.PrefetchScalarGridSpec(
        num_scalar_prefetch=0,
        grid=(B, num_q_tiles),
        in_specs=[pl.BlockSpec((1, q_tile, E), lambda b, q: (b, q, 0))]
                 + [weight_spec] * len(weights),
        out_specs=pl.BlockSpec((1, q_tile, E), lambda b, q: (b, q, 0)),
        scratch_shapes=[
            pltpu.VMEM((num_heads, T, hs), bf),   # K cache, head-major (per batch element)
            pltpu.VMEM((num_heads, T, hs), bf),   # V cache, head-major
            pltpu.VMEM((q_tile, E), bf),          # per-head attention-output staging slab
        ],
        # TODO(synk): for very long T on v7x (64 MiB VMEM) the (T,E) K/V caches should spill to an
        # HBM scratch with manual double-buffered make_async_copy inside the KV loop.
    )

    # Derive the VMEM budget from the actual footprint instead of hard-coding.
    weight_bytes = sum(int(w.size) * w.dtype.itemsize for w in weights)
    io_bytes = 2 * 2 * q_tile * E * 4            # x-in + out tiles, double-buffered, f32
    kv_bytes = 2 * T * E * 2                     # bf16 K + V caches
    work_bytes = q_tile * E * 2 + 24 * q_tile * E * 4   # staging slab + intermediates headroom
    needed = weight_bytes + io_bytes + kv_bytes + work_bytes
    vmem_cap = 128 * 1024 * 1024
    try:
        vmem_cap = int(pltpu.get_tpu_info().vmem_capacity_bytes)
    except Exception:
        pass
    vmem_limit = int(min(max(needed, 32 * 1024 * 1024), vmem_cap))

    flops = B * (8 * T * E * E            # fused qkv + output projection
                 + 2 * T * T * E          # scores + p@v (causal ~ half of full)
                 + 16 * T * E * E)        # FFN (E -> 4E -> E)
    transcendentals = B * num_heads * T * T // 2 + 4 * B * T
    bytes_accessed = int(x.size) * 4 * 2 + weight_bytes

    kernel = functools.partial(_block_kernel, num_heads=num_heads, q_tile=q_tile)
    # TODO(synk): on v7x with B == 1, add a head/q-range split across the two TensorCores
    # (pl.core_map) so the second core does not idle.
    return pl.pallas_call(
        kernel,
        out_shape=jax.ShapeDtypeStruct((B, T, E), jnp.float32),
        grid_spec=grid_spec,
        compiler_params=pltpu.CompilerParams(
            # Batch axis parallel (megacore / v7x two TCs); query-tile axis must stay sequential
            # because later tiles read K/V cached by earlier tiles of the same batch element.
            dimension_semantics=("parallel", "arbitrary"),
            vmem_limit_bytes=vmem_limit,
        ),
        cost_estimate=pl.CostEstimate(
            flops=int(flops),
            transcendentals=int(transcendentals),
            bytes_accessed=int(bytes_accessed)),
    )(x, *weights)


# ---------------------------------------------------------------------------
# Pure-JAX reference (f32 everywhere) for correctness check
# ---------------------------------------------------------------------------
def reference_block(x, params, num_heads):
    B, T, E = x.shape
    hs = E // num_heads
    scale = 1.0 / (hs ** 0.5)

    def ln(z, w, b, eps=1e-5):
        mu = jnp.mean(z, -1, keepdims=True)
        var = jnp.mean((z - mu) ** 2, -1, keepdims=True)
        return (z - mu) / jnp.sqrt(var + eps) * w + b

    h = ln(x, params["ln1_w"][0], params["ln1_b"][0])
    q = h @ params["wq"]
    k = h @ params["wk"]
    v = h @ params["wv"]
    q = q.reshape(B, T, num_heads, hs).transpose(0, 2, 1, 3)
    k = k.reshape(B, T, num_heads, hs).transpose(0, 2, 1, 3)
    v = v.reshape(B, T, num_heads, hs).transpose(0, 2, 1, 3)
    s = jnp.einsum("bhqd,bhkd->bhqk", q, k) * scale
    mask = jnp.tril(jnp.ones((T, T), bool))
    s = jnp.where(mask, s, -1e30)
    p = jax.nn.softmax(s, axis=-1)
    o = jnp.einsum("bhqk,bhkd->bhqd", p, v).transpose(0, 2, 1, 3).reshape(B, T, E)
    o = o @ params["wo"] + params["bo"][0]
    x1 = x + o
    h2 = ln(x1, params["ln2_w"][0], params["ln2_b"][0])
    ff = jnp.maximum(h2 @ params["w1"] + params["b1"][0], 0.0)
    ff = ff @ params["w2"] + params["b2"][0]
    return x1 + ff


# ---------------------------------------------------------------------------
# Main
# ---------------------------------------------------------------------------
if __name__ == "__main__":
    def run_case(B, T, E, H, q_tile=None):
        key = jax.random.PRNGKey(0)
        keys = jax.random.split(key, 8)
        x = jax.random.normal(keys[0], (B, T, E), dtype=jnp.float32)
        init = lambda k, shape: (0.02 * jax.random.normal(k, shape)).astype(jnp.float32)
        params = {
            "ln1_w": jnp.ones((1, E), jnp.float32),
            "ln1_b": jnp.zeros((1, E), jnp.float32),
            "ln2_w": jnp.ones((1, E), jnp.float32),
            "ln2_b": jnp.zeros((1, E), jnp.float32),
            "wq": init(keys[1], (E, E)),
            "wk": init(keys[2], (E, E)),
            "wv": init(keys[3], (E, E)),
            "wo": init(keys[4], (E, E)),
            "bo": jnp.zeros((1, E), jnp.float32),
            "w1": init(keys[5], (E, 4 * E)),
            "b1": jnp.zeros((1, 4 * E), jnp.float32),
            "w2": init(keys[6], (4 * E, E)),
            "b2": jnp.zeros((1, E), jnp.float32),
        }
        out = jax.block_until_ready(transformer_block(x, params, H, q_tile=q_tile))
        ref = reference_block(x, params, H)
        assert out.shape == (B, T, E)
        err = float(jnp.max(jnp.abs(out - ref)))
        # bf16 MXU operands + approx reciprocal -> relaxed tolerance vs. the f32 reference.
        assert jnp.allclose(out, ref, rtol=2e-2, atol=2e-2), f"mismatch vs. reference (max err {err})"

    # block_size=8, embedding_size=32, num_heads=4 (matches the module's intended small config)
    run_case(2, 8, 32, 4)
    # multi query-tile config: exercises the KV cache across tiles + causal block skipping
    run_case(2, 16, 32, 4, q_tile=8)

    print("KERNEL_OK")
</pallas_src>

<mosaic_0001>
module attributes {stable_mosaic.version = 11 : i64} {
  func.func @_block_kernel(%arg0: i32, %arg1: i32, %arg2: memref<1x8x32xf32, #tpu.memory_space<vmem>>, %arg3: memref<1x32xf32, #tpu.memory_space<vmem>>, %arg4: memref<1x32xf32, #tpu.memory_space<vmem>>, %arg5: memref<32x96xbf16, #tpu.memory_space<vmem>>, %arg6: memref<32x32xbf16, #tpu.memory_space<vmem>>, %arg7: memref<1x32xf32, #tpu.memory_space<vmem>>, %arg8: memref<1x32xf32, #tpu.memory_space<vmem>>, %arg9: memref<1x32xf32, #tpu.memory_space<vmem>>, %arg10: memref<32x128xbf16, #tpu.memory_space<vmem>>, %arg11: memref<1x128xf32, #tpu.memory_space<vmem>>, %arg12: memref<128x32xbf16, #tpu.memory_space<vmem>>, %arg13: memref<1x32xf32, #tpu.memory_space<vmem>>, %arg14: memref<1x8x32xf32, #tpu.memory_space<vmem>>, %arg15: memref<4x8x8xbf16, #tpu.memory_space<vmem>>, %arg16: memref<4x8x8xbf16, #tpu.memory_space<vmem>>, %arg17: memref<8x32xbf16, #tpu.memory_space<vmem>>) attributes {dimension_semantics = [#tpu.dimension_semantics<parallel>, #tpu.dimension_semantics<arbitrary>], iteration_bounds = array<i64: 2, 1>, scalar_prefetch = 0 : i64, scratch_operands = 3 : i64, tpu.core_type = #tpu.core_type<tc>, window_params = [{transform_indices = @transform_0, window_bounds = array<i64: 1, 8, 32>}, {pipeline_mode = #tpu.pipeline_mode<synchronous>, transform_indices = @transform_1, window_bounds = array<i64: 1, 32>}, {pipeline_mode = #tpu.pipeline_mode<synchronous>, transform_indices = @transform_2, window_bounds = array<i64: 1, 32>}, {pipeline_mode = #tpu.pipeline_mode<synchronous>, transform_indices = @transform_3, window_bounds = array<i64: 32, 96>}, {pipeline_mode = #tpu.pipeline_mode<synchronous>, transform_indices = @transform_4, window_bounds = array<i64: 32, 32>}, {pipeline_mode = #tpu.pipeline_mode<synchronous>, transform_indices = @transform_5, window_bounds = array<i64: 1, 32>}, {pipeline_mode = #tpu.pipeline_mode<synchronous>, transform_indices = @transform_6, window_bounds = array<i64: 1, 32>}, {pipeline_mode = #tpu.pipeline_mode<synchronous>, transform_indices = @transform_7, window_bounds = array<i64: 1, 32>}, {pipeline_mode = #tpu.pipeline_mode<synchronous>, transform_indices = @transform_8, window_bounds = array<i64: 32, 128>}, {pipeline_mode = #tpu.pipeline_mode<synchronous>, transform_indices = @transform_9, window_bounds = array<i64: 1, 128>}, {pipeline_mode = #tpu.pipeline_mode<synchronous>, transform_indices = @transform_10, window_bounds = array<i64: 128, 32>}, {pipeline_mode = #tpu.pipeline_mode<synchronous>, transform_indices = @transform_11, window_bounds = array<i64: 1, 32>}, {transform_indices = @transform_12, window_bounds = array<i64: 1, 8, 32>}]} {
    %c8_i32 = arith.constant 8 : i32
    %0 = arith.muli %arg1, %c8_i32 : i32
    %1 = tpu.assume_multiple %0, 8 : i32
    %c0 = arith.constant 0 : index
    %c0_0 = arith.constant 0 : index
    %c0_1 = arith.constant 0 : index
    %2 = vector.load %arg2[%c0, %c0_0, %c0_1] : memref<1x8x32xf32, #tpu.memory_space<vmem>>, vector<1x8x32xf32>
    %3 = vector.shape_cast %2 : vector<1x8x32xf32> to vector<8x32xf32>
    %c0_2 = arith.constant 0 : index
    %c0_3 = arith.constant 0 : index
    %4 = vector.load %arg3[%c0_2, %c0_3] : memref<1x32xf32, #tpu.memory_space<vmem>>, vector<1x32xf32>
    %5 = vector.shape_cast %4 : vector<1x32xf32> to vector<32xf32>
    %c0_4 = arith.constant 0 : index
    %c0_5 = arith.constant 0 : index
    %6 = vector.load %arg4[%c0_4, %c0_5] : memref<1x32xf32, #tpu.memory_space<vmem>>, vector<1x32xf32>
    %7 = vector.shape_cast %6 : vector<1x32xf32> to vector<32xf32>
    %cst = arith.constant dense<0.000000e+00> : vector<8xf32>
    %8 = vector.multi_reduction <add>, %3, %cst [1] : vector<8x32xf32> to vector<8xf32>
    %9 = vector.shape_cast %8 : vector<8xf32> to vector<8x1xf32>
    %cst_6 = arith.constant 3.200000e+01 : f32
    %10 = vector.broadcast %cst_6 : f32 to vector<8x1xf32>
    %11 = arith.divf %9, %10 : vector<8x1xf32>
    %12 = vector.broadcast %11 : vector<8x1xf32> to vector<8x32xf32>
    %13 = arith.subf %3, %12 : vector<8x32xf32>
    %14 = arith.mulf %13, %13 : vector<8x32xf32>
    %cst_7 = arith.constant dense<0.000000e+00> : vector<8xf32>
    %15 = vector.multi_reduction <add>, %14, %cst_7 [1] : vector<8x32xf32> to vector<8xf32>
    %16 = vector.shape_cast %15 : vector<8xf32> to vector<8x1xf32>
    %cst_8 = arith.constant 3.200000e+01 : f32
    %17 = vector.broadcast %cst_8 : f32 to vector<8x1xf32>
    %18 = arith.divf %16, %17 : vector<8x1xf32>
    %19 = vector.broadcast %11 : vector<8x1xf32> to vector<8x32xf32>
    %20 = arith.subf %3, %19 : vector<8x32xf32>
    %cst_9 = arith.constant 9.99999974E-6 : f32
    %21 = vector.broadcast %cst_9 : f32 to vector<8x1xf32>
    %22 = arith.addf %18, %21 : vector<8x1xf32>
    %23 = math.rsqrt %22 : vector<8x1xf32>
    %24 = vector.broadcast %23 : vector<8x1xf32> to vector<8x32xf32>
    %25 = arith.mulf %20, %24 : vector<8x32xf32>
    %26 = vector.shape_cast %5 : vector<32xf32> to vector<1x32xf32>
    %27 = vector.broadcast %26 : vector<1x32xf32> to vector<8x32xf32>
    %28 = arith.mulf %25, %27 : vector<8x32xf32>
    %29 = vector.shape_cast %7 : vector<32xf32> to vector<1x32xf32>
    %30 = vector.broadcast %29 : vector<1x32xf32> to vector<8x32xf32>
    %31 = arith.addf %28, %30 : vector<8x32xf32>
    %32 = arith.truncf %31 : vector<8x32xf32> to vector<8x32xbf16>
    %c0_10 = arith.constant 0 : index
    %c0_11 = arith.constant 0 : index
    %33 = vector.load %arg5[%c0_10, %c0_11] : memref<32x96xbf16, #tpu.memory_space<vmem>>, vector<32x96xbf16>
    %cst_12 = arith.constant dense<0.000000e+00> : vector<8x96xf32>
    %34 = tpu.matmul %32, %33, %cst_12 {dimension_numbers = #tpu.dot_dimension_numbers<[1], [0], [0], [1], [0, 0, 1, 1], [], []>} : vector<8x32xbf16>, vector<32x96xbf16>, vector<8x96xf32> -> vector<8x96xf32>
    %35 = vector.extract_strided_slice %34 {offsets = [0, 0], sizes = [8, 32], strides = [1, 1]} : vector<8x96xf32> to vector<8x32xf32>
    %cst_13 = arith.constant 0.353553385 : f32
    %36 = vector.broadcast %cst_13 : f32 to vector<8x32xf32>
    %37 = arith.mulf %35, %36 : vector<8x32xf32>
    %38 = vector.extract_strided_slice %37 {offsets = [0, 0], sizes = [8, 8], strides = [1, 1]} : vector<8x32xf32> to vector<8x8xf32>
    %39 = vector.extract_strided_slice %37 {offsets = [0, 8], sizes = [8, 8], strides = [1, 1]} : vector<8x32xf32> to vector<8x8xf32>
    %40 = vector.extract_strided_slice %37 {offsets = [0, 16], sizes = [8, 8], strides = [1, 1]} : vector<8x32xf32> to vector<8x8xf32>
    %41 = vector.extract_strided_slice %37 {offsets = [0, 24], sizes = [8, 8], strides = [1, 1]} : vector<8x32xf32> to vector<8x8xf32>
    %42 = vector.shape_cast %38 : vector<8x8xf32> to vector<1x8x8xf32>
    %43 = vector.shape_cast %39 : vector<8x8xf32> to vector<1x8x8xf32>
    %44 = vector.shape_cast %40 : vector<8x8xf32> to vector<1x8x8xf32>
    %45 = vector.shape_cast %41 : vector<8x8xf32> to vector<1x8x8xf32>
    %46 = tpu.concatenate %42, %43, %44, %45 in 0 : vector<1x8x8xf32>, vector<1x8x8xf32>, vector<1x8x8xf32>, vector<1x8x8xf32> -> vector<4x8x8xf32>
    %47 = arith.truncf %46 : vector<4x8x8xf32> to vector<4x8x8xbf16>
    %48 = vector.extract_strided_slice %34 {offsets = [0, 32], sizes = [8, 32], strides = [1, 1]} : vector<8x96xf32> to vector<8x32xf32>
    %49 = vector.extract_strided_slice %48 {offsets = [0, 0], sizes = [8, 8], strides = [1, 1]} : vector<8x32xf32> to vector<8x8xf32>
    %50 = vector.extract_strided_slice %48 {offsets = [0, 8], sizes = [8, 8], strides = [1, 1]} : vector<8x32xf32> to vector<8x8xf32>
    %51 = vector.extract_strided_slice %48 {offsets = [0, 16], sizes = [8, 8], strides = [1, 1]} : vector<8x32xf32> to vector<8x8xf32>
    %52 = vector.extract_strided_slice %48 {offsets = [0, 24], sizes = [8, 8], strides = [1, 1]} : vector<8x32xf32> to vector<8x8xf32>
    %53 = vector.shape_cast %49 : vector<8x8xf32> to vector<1x8x8xf32>
    %54 = vector.shape_cast %50 : vector<8x8xf32> to vector<1x8x8xf32>
    %55 = vector.shape_cast %51 : vector<8x8xf32> to vector<1x8x8xf32>
    %56 = vector.shape_cast %52 : vector<8x8xf32> to vector<1x8x8xf32>
    %57 = tpu.concatenate %53, %54, %55, %56 in 0 : vector<1x8x8xf32>, vector<1x8x8xf32>, vector<1x8x8xf32>, vector<1x8x8xf32> -> vector<4x8x8xf32>
    %58 = arith.truncf %57 : vector<4x8x8xf32> to vector<4x8x8xbf16>
    %59 = vector.extract_strided_slice %34 {offsets = [0, 64], sizes = [8, 32], strides = [1, 1]} : vector<8x96xf32> to vector<8x32xf32>
    %60 = vector.extract_strided_slice %59 {offsets = [0, 0], sizes = [8, 8], strides = [1, 1]} : vector<8x32xf32> to vector<8x8xf32>
    %61 = vector.extract_strided_slice %59 {offsets = [0, 8], sizes = [8, 8], strides = [1, 1]} : vector<8x32xf32> to vector<8x8xf32>
    %62 = vector.extract_strided_slice %59 {offsets = [0, 16], sizes = [8, 8], strides = [1, 1]} : vector<8x32xf32> to vector<8x8xf32>
    %63 = vector.extract_strided_slice %59 {offsets = [0, 24], sizes = [8, 8], strides = [1, 1]} : vector<8x32xf32> to vector<8x8xf32>
    %64 = vector.shape_cast %60 : vector<8x8xf32> to vector<1x8x8xf32>
    %65 = vector.shape_cast %61 : vector<8x8xf32> to vector<1x8x8xf32>
    %66 = vector.shape_cast %62 : vector<8x8xf32> to vector<1x8x8xf32>
    %67 = vector.shape_cast %63 : vector<8x8xf32> to vector<1x8x8xf32>
    %68 = tpu.concatenate %64, %65, %66, %67 in 0 : vector<1x8x8xf32>, vector<1x8x8xf32>, vector<1x8x8xf32>, vector<1x8x8xf32> -> vector<4x8x8xf32>
    %69 = arith.truncf %68 : vector<4x8x8xf32> to vector<4x8x8xbf16>
    %c0_14 = arith.constant 0 : index
    %70 = arith.index_cast %1 : i32 to index
    %c0_15 = arith.constant 0 : index
    %71 = vector.load %arg15[%c0_14, %70, %c0_15] : memref<4x8x8xbf16, #tpu.memory_space<vmem>>, vector<4x8x8xbf16>
    tpu.vector_store %arg15[%c0_14, %70, %c0_15], %58 {strides = array<i32>} : memref<4x8x8xbf16, #tpu.memory_space<vmem>>, vector<4x8x8xbf16>,
    %c0_16 = arith.constant 0 : index
    %72 = arith.index_cast %1 : i32 to index
    %c0_17 = arith.constant 0 : index
    %73 = vector.load %arg16[%c0_16, %72, %c0_17] : memref<4x8x8xbf16, #tpu.memory_space<vmem>>, vector<4x8x8xbf16>
    tpu.vector_store %arg16[%c0_16, %72, %c0_17], %69 {strides = array<i32>} : memref<4x8x8xbf16, #tpu.memory_space<vmem>>, vector<4x8x8xbf16>,
    %cst_18 = arith.constant 0xFF800000 : f32
    %74 = vector.broadcast %cst_18 : f32 to vector<4x8x1xf32>
    %cst_19 = arith.constant 0.000000e+00 : f32
    %75 = vector.broadcast %cst_19 : f32 to vector<4x8x1xf32>
    %cst_20 = arith.constant 0.000000e+00 : f32
    %76 = vector.broadcast %cst_20 : f32 to vector<4x8x8xf32>
    %c0_i32 = arith.constant 0 : i32
    %77 = arith.subi %arg1, %c0_i32 : i32
    %78 = arith.addi %c0_i32, %77 : i32
    %c1_i32 = arith.constant 1 : i32
    %79:3 = scf.for %arg18 = %c0_i32 to %78 step %c1_i32 iter_args(%arg19 = %74, %arg20 = %75, %arg21 = %76) -> (vector<4x8x1xf32>, vector<4x8x1xf32>, vector<4x8x8xf32>)  : i32 {
      %c8_i32_61 = arith.constant 8 : i32
      %201 = arith.muli %arg18, %c8_i32_61 : i32
      %202 = tpu.assume_multiple %201, 8 : i32
      %c0_62 = arith.constant 0 : index
      %203 = arith.index_cast %202 : i32 to index
      %c0_63 = arith.constant 0 : index
      %204 = vector.load %arg15[%c0_62, %203, %c0_63] : memref<4x8x8xbf16, #tpu.memory_space<vmem>>, vector<4x8x8xbf16>
      %c0_64 = arith.constant 0 : index
      %205 = arith.index_cast %202 : i32 to index
      %c0_65 = arith.constant 0 : index
      %206 = vector.load %arg16[%c0_64, %205, %c0_65] : memref<4x8x8xbf16, #tpu.memory_space<vmem>>, vector<4x8x8xbf16>
      "tpu.trace_start"() <{level = 10 : i32, message = "hqd,hkd->hqk"}> : () -> ()
      %cst_66 = arith.constant dense<0.000000e+00> : vector<4x8x8xf32>
      %207 = tpu.matmul %47, %204, %cst_66 {dimension_numbers = #tpu.dot_dimension_numbers<[2], [2], [1], [1], [0, 0, 0, 1, 1, 1], [0], [0]>} : vector<4x8x8xbf16>, vector<4x8x8xbf16>, vector<4x8x8xf32> -> vector<4x8x8xf32>
      "tpu.trace_stop"() : () -> ()
      %cst_67 = arith.constant dense<0xFF800000> : vector<4x8xf32>
      %208 = vector.multi_reduction <maximumf>, %207, %cst_67 [2] : vector<4x8x8xf32> to vector<4x8xf32>
      %209 = vector.shape_cast %208 : vector<4x8xf32> to vector<4x8x1xf32>
      %210 = arith.maximumf %arg19, %209 : vector<4x8x1xf32>
      %211 = arith.subf %arg19, %210 : vector<4x8x1xf32>
      %212 = math.exp %211 : vector<4x8x1xf32>
      %213 = vector.broadcast %210 : vector<4x8x1xf32> to vector<4x8x8xf32>
      %214 = arith.subf %207, %213 : vector<4x8x8xf32>
      %215 = math.exp %214 : vector<4x8x8xf32>
      %216 = arith.mulf %212, %arg20 : vector<4x8x1xf32>
      %cst_68 = arith.constant dense<0.000000e+00> : vector<4x8xf32>
      %217 = vector.multi_reduction <add>, %215, %cst_68 [2] : vector<4x8x8xf32> to vector<4x8xf32>
      %218 = vector.shape_cast %217 : vector<4x8xf32> to vector<4x8x1xf32>
      %219 = arith.addf %216, %218 : vector<4x8x1xf32>
      %220 = arith.truncf %215 : vector<4x8x8xf32> to vector<4x8x8xbf16>
      "tpu.trace_start"() <{level = 10 : i32, message = "hqk,hkd->hqd"}> : () -> ()
      %cst_69 = arith.constant dense<0.000000e+00> : vector<4x8x8xf32>
      %221 = tpu.matmul %220, %206, %cst_69 {dimension_numbers = #tpu.dot_dimension_numbers<[2], [1], [1], [2], [0, 0, 0, 1, 1, 2], [0], [0]>} : vector<4x8x8xbf16>, vector<4x8x8xbf16>, vector<4x8x8xf32> -> vector<4x8x8xf32>
      "tpu.trace_stop"() : () -> ()
      %222 = vector.broadcast %212 : vector<4x8x1xf32> to vector<4x8x8xf32>
      %223 = arith.mulf %222, %arg21 : vector<4x8x8xf32>
      %224 = arith.addf %223, %221 : vector<4x8x8xf32>
      scf.yield %210, %219, %224 : vector<4x8x1xf32>, vector<4x8x1xf32>, vector<4x8x8xf32>
    }
    %80 = tpu.iota {dimensions = array<i32: 0>} : vector<8x8xi32>
    %81 = tpu.iota {dimensions = array<i32: 1>} : vector<8x8xi32>
    "tpu.trace_start"() <{level = 10 : i32, message = "hqd,hkd->hqk"}> : () -> ()
    %cst_21 = arith.constant dense<0.000000e+00> : vector<4x8x8xf32>
    %82 = tpu.matmul %47, %58, %cst_21 {dimension_numbers = #tpu.dot_dimension_numbers<[2], [2], [1], [1], [0, 0, 0, 1, 1, 1], [0], [0]>} : vector<4x8x8xbf16>, vector<4x8x8xbf16>, vector<4x8x8xf32> -> vector<4x8x8xf32>
    "tpu.trace_stop"() : () -> ()
    %83 = arith.cmpi sle, %81, %80 : vector<8x8xi32>
    %84 = vector.shape_cast %83 : vector<8x8xi1> to vector<1x8x8xi1>
    %cst_22 = arith.constant -1.000000e+30 : f32
    %85 = vector.shape_cast %84 : vector<1x8x8xi1> to vector<1x8x8xi1>
    %86 = vector.broadcast %85 : vector<1x8x8xi1> to vector<4x8x8xi1>
    %87 = vector.broadcast %cst_22 : f32 to vector<4x8x8xf32>
    %88 = arith.select %86, %82, %87 : vector<4x8x8xi1>, vector<4x8x8xf32>
    %cst_23 = arith.constant dense<0xFF800000> : vector<4x8xf32>
    %89 = vector.multi_reduction <maximumf>, %88, %cst_23 [2] : vector<4x8x8xf32> to vector<4x8xf32>
    %90 = vector.shape_cast %89 : vector<4x8xf32> to vector<4x8x1xf32>
    %91 = arith.maximumf %79#0, %90 : vector<4x8x1xf32>
    %92 = arith.subf %79#0, %91 : vector<4x8x1xf32>
    %93 = math.exp %92 : vector<4x8x1xf32>
    %94 = vector.broadcast %91 : vector<4x8x1xf32> to vector<4x8x8xf32>
    %95 = arith.subf %88, %94 : vector<4x8x8xf32>
    %96 = math.exp %95 : vector<4x8x8xf32>
    %97 = arith.mulf %93, %79#1 : vector<4x8x1xf32>
    %cst_24 = arith.constant dense<0.000000e+00> : vector<4x8xf32>
    %98 = vector.multi_reduction <add>, %96, %cst_24 [2] : vector<4x8x8xf32> to vector<4x8xf32>
    %99 = vector.shape_cast %98 : vector<4x8xf32> to vector<4x8x1xf32>
    %100 = arith.addf %97, %99 : vector<4x8x1xf32>
    %101 = arith.truncf %96 : vector<4x8x8xf32> to vector<4x8x8xbf16>
    "tpu.trace_start"() <{level = 10 : i32, message = "hqk,hkd->hqd"}> : () -> ()
    %cst_25 = arith.constant dense<0.000000e+00> : vector<4x8x8xf32>
    %102 = tpu.matmul %101, %69, %cst_25 {dimension_numbers = #tpu.dot_dimension_numbers<[2], [1], [1], [2], [0, 0, 0, 1, 1, 2], [0], [0]>} : vector<4x8x8xbf16>, vector<4x8x8xbf16>, vector<4x8x8xf32> -> vector<4x8x8xf32>
    "tpu.trace_stop"() : () -> ()
    %103 = vector.broadcast %93 : vector<4x8x1xf32> to vector<4x8x8xf32>
    %104 = arith.mulf %103, %79#2 : vector<4x8x8xf32>
    %105 = arith.addf %104, %102 : vector<4x8x8xf32>
    %106 = vector.extract_strided_slice %105 {offsets = [0, 0, 0], sizes = [1, 8, 8], strides = [1, 1, 1]} : vector<4x8x8xf32> to vector<1x8x8xf32>
    %107 = vector.shape_cast %106 : vector<1x8x8xf32> to vector<8x8xf32>
    %108 = vector.extract_strided_slice %100 {offsets = [0, 0, 0], sizes = [1, 8, 1], strides = [1, 1, 1]} : vector<4x8x1xf32> to vector<1x8x1xf32>
    %109 = vector.shape_cast %108 : vector<1x8x1xf32> to vector<8x1xf32>
    %110 = tpu.reciprocal %109 {approx = true} : vector<8x1xf32> -> vector<8x1xf32>
    %111 = vector.broadcast %110 : vector<8x1xf32> to vector<8x8xf32>
    %112 = arith.mulf %107, %111 : vector<8x8xf32>
    %113 = arith.truncf %112 : vector<8x8xf32> to vector<8x8xbf16>
    %c0_26 = arith.constant 0 : index
    %c0_27 = arith.constant 0 : index
    %114 = vector.load %arg17[%c0_26, %c0_27] : memref<8x32xbf16, #tpu.memory_space<vmem>>, vector<8x8xbf16>
    tpu.vector_store %arg17[%c0_26, %c0_27], %113 {strides = array<i32>} : memref<8x32xbf16, #tpu.memory_space<vmem>>, vector<8x8xbf16>,
    %115 = vector.extract_strided_slice %105 {offsets = [1, 0, 0], sizes = [1, 8, 8], strides = [1, 1, 1]} : vector<4x8x8xf32> to vector<1x8x8xf32>
    %116 = vector.shape_cast %115 : vector<1x8x8xf32> to vector<8x8xf32>
    %117 = vector.extract_strided_slice %100 {offsets = [1, 0, 0], sizes = [1, 8, 1], strides = [1, 1, 1]} : vector<4x8x1xf32> to vector<1x8x1xf32>
    %118 = vector.shape_cast %117 : vector<1x8x1xf32> to vector<8x1xf32>
    %119 = tpu.reciprocal %118 {approx = true} : vector<8x1xf32> -> vector<8x1xf32>
    %120 = vector.broadcast %119 : vector<8x1xf32> to vector<8x8xf32>
    %121 = arith.mulf %116, %120 : vector<8x8xf32>
    %122 = arith.truncf %121 : vector<8x8xf32> to vector<8x8xbf16>
    %c0_28 = arith.constant 0 : index
    %c8 = arith.constant 8 : index
    %123 = vector.load %arg17[%c0_28, %c8] : memref<8x32xbf16, #tpu.memory_space<vmem>>, vector<8x8xbf16>
    tpu.vector_store %arg17[%c0_28, %c8], %122 {strides = array<i32>} : memref<8x32xbf16, #tpu.memory_space<vmem>>, vector<8x8xbf16>,
    %124 = vector.extract_strided_slice %105 {offsets = [2, 0, 0], sizes = [1, 8, 8], strides = [1, 1, 1]} : vector<4x8x8xf32> to vector<1x8x8xf32>
    %125 = vector.shape_cast %124 : vector<1x8x8xf32> to vector<8x8xf32>
    %126 = vector.extract_strided_slice %100 {offsets = [2, 0, 0], sizes = [1, 8, 1], strides = [1, 1, 1]} : vector<4x8x1xf32> to vector<1x8x1xf32>
    %127 = vector.shape_cast %126 : vector<1x8x1xf32> to vector<8x1xf32>
    %128 = tpu.reciprocal %127 {approx = true} : vector<8x1xf32> -> vector<8x1xf32>
    %129 = vector.broadcast %128 : vector<8x1xf32> to vector<8x8xf32>
    %130 = arith.mulf %125, %129 : vector<8x8xf32>
    %131 = arith.truncf %130 : vector<8x8xf32> to vector<8x8xbf16>
    %c0_29 = arith.constant 0 : index
    %c16 = arith.constant 16 : index
    %132 = vector.load %arg17[%c0_29, %c16] : memref<8x32xbf16, #tpu.memory_space<vmem>>, vector<8x8xbf16>
    tpu.vector_store %arg17[%c0_29, %c16], %131 {strides = array<i32>} : memref<8x32xbf16, #tpu.memory_space<vmem>>, vector<8x8xbf16>,
    %133 = vector.extract_strided_slice %105 {offsets = [3, 0, 0], sizes = [1, 8, 8], strides = [1, 1, 1]} : vector<4x8x8xf32> to vector<1x8x8xf32>
    %134 = vector.shape_cast %133 : vector<1x8x8xf32> to vector<8x8xf32>
    %135 = vector.extract_strided_slice %100 {offsets = [3, 0, 0], sizes = [1, 8, 1], strides = [1, 1, 1]} : vector<4x8x1xf32> to vector<1x8x1xf32>
    %136 = vector.shape_cast %135 : vector<1x8x1xf32> to vector<8x1xf32>
    %137 = tpu.reciprocal %136 {approx = true} : vector<8x1xf32> -> vector<8x1xf32>
    %138 = vector.broadcast %137 : vector<8x1xf32> to vector<8x8xf32>
    %139 = arith.mulf %134, %138 : vector<8x8xf32>
    %140 = arith.truncf %139 : vector<8x8xf32> to vector<8x8xbf16>
    %c0_30 = arith.constant 0 : index
    %c24 = arith.constant 24 : index
    %141 = vector.load %arg17[%c0_30, %c24] : memref<8x32xbf16, #tpu.memory_space<vmem>>, vector<8x8xbf16>
    tpu.vector_store %arg17[%c0_30, %c24], %140 {strides = array<i32>} : memref<8x32xbf16, #tpu.memory_space<vmem>>, vector<8x8xbf16>,
    %c0_31 = arith.constant 0 : index
    %c0_32 = arith.constant 0 : index
    %142 = vector.load %arg17[%c0_31, %c0_32] : memref<8x32xbf16, #tpu.memory_space<vmem>>, vector<8x32xbf16>
    %c0_33 = arith.constant 0 : index
    %c0_34 = arith.constant 0 : index
    %143 = vector.load %arg6[%c0_33, %c0_34] : memref<32x32xbf16, #tpu.memory_space<vmem>>, vector<32x32xbf16>
    %cst_35 = arith.constant dense<0.000000e+00> : vector<8x32xf32>
    %144 = tpu.matmul %142, %143, %cst_35 {dimension_numbers = #tpu.dot_dimension_numbers<[1], [0], [0], [1], [0, 0, 1, 1], [], []>} : vector<8x32xbf16>, vector<32x32xbf16>, vector<8x32xf32> -> vector<8x32xf32>
    %145 = arith.addf %3, %144 : vector<8x32xf32>
    %c0_36 = arith.constant 0 : index
    %c0_37 = arith.constant 0 : index
    %146 = vector.load %arg7[%c0_36, %c0_37] : memref<1x32xf32, #tpu.memory_space<vmem>>, vector<1x32xf32>
    %147 = vector.shape_cast %146 : vector<1x32xf32> to vector<32xf32>
    %148 = vector.shape_cast %147 : vector<32xf32> to vector<1x32xf32>
    %149 = vector.broadcast %148 : vector<1x32xf32> to vector<8x32xf32>
    %150 = arith.addf %145, %149 : vector<8x32xf32>
    %c0_38 = arith.constant 0 : index
    %c0_39 = arith.constant 0 : index
    %151 = vector.load %arg8[%c0_38, %c0_39] : memref<1x32xf32, #tpu.memory_space<vmem>>, vector<1x32xf32>
    %152 = vector.shape_cast %151 : vector<1x32xf32> to vector<32xf32>
    %c0_40 = arith.constant 0 : index
    %c0_41 = arith.constant 0 : index
    %153 = vector.load %arg9[%c0_40, %c0_41] : memref<1x32xf32, #tpu.memory_space<vmem>>, vector<1x32xf32>
    %154 = vector.shape_cast %153 : vector<1x32xf32> to vector<32xf32>
    %cst_42 = arith.constant dense<0.000000e+00> : vector<8xf32>
    %155 = vector.multi_reduction <add>, %150, %cst_42 [1] : vector<8x32xf32> to vector<8xf32>
    %156 = vector.shape_cast %155 : vector<8xf32> to vector<8x1xf32>
    %cst_43 = arith.constant 3.200000e+01 : f32
    %157 = vector.broadcast %cst_43 : f32 to vector<8x1xf32>
    %158 = arith.divf %156, %157 : vector<8x1xf32>
    %159 = vector.broadcast %158 : vector<8x1xf32> to vector<8x32xf32>
    %160 = arith.subf %150, %159 : vector<8x32xf32>
    %161 = arith.mulf %160, %160 : vector<8x32xf32>
    %cst_44 = arith.constant dense<0.000000e+00> : vector<8xf32>
    %162 = vector.multi_reduction <add>, %161, %cst_44 [1] : vector<8x32xf32> to vector<8xf32>
    %163 = vector.shape_cast %162 : vector<8xf32> to vector<8x1xf32>
    %cst_45 = arith.constant 3.200000e+01 : f32
    %164 = vector.broadcast %cst_45 : f32 to vector<8x1xf32>
    %165 = arith.divf %163, %164 : vector<8x1xf32>
    %166 = vector.broadcast %158 : vector<8x1xf32> to vector<8x32xf32>
    %167 = arith.subf %150, %166 : vector<8x32xf32>
    %cst_46 = arith.constant 9.99999974E-6 : f32
    %168 = vector.broadcast %cst_46 : f32 to vector<8x1xf32>
    %169 = arith.addf %165, %168 : vector<8x1xf32>
    %170 = math.rsqrt %169 : vector<8x1xf32>
    %171 = vector.broadcast %170 : vector<8x1xf32> to vector<8x32xf32>
    %172 = arith.mulf %167, %171 : vector<8x32xf32>
    %173 = vector.shape_cast %152 : vector<32xf32> to vector<1x32xf32>
    %174 = vector.broadcast %173 : vector<1x32xf32> to vector<8x32xf32>
    %175 = arith.mulf %172, %174 : vector<8x32xf32>
    %176 = vector.shape_cast %154 : vector<32xf32> to vector<1x32xf32>
    %177 = vector.broadcast %176 : vector<1x32xf32> to vector<8x32xf32>
    %178 = arith.addf %175, %177 : vector<8x32xf32>
    %179 = arith.truncf %178 : vector<8x32xf32> to vector<8x32xbf16>
    %c0_47 = arith.constant 0 : index
    %c0_48 = arith.constant 0 : index
    %180 = vector.load %arg10[%c0_47, %c0_48] : memref<32x128xbf16, #tpu.memory_space<vmem>>, vector<32x128xbf16>
    %cst_49 = arith.constant dense<0.000000e+00> : vector<8x128xf32>
    %181 = tpu.matmul %179, %180, %cst_49 {dimension_numbers = #tpu.dot_dimension_numbers<[1], [0], [0], [1], [0, 0, 1, 1], [], []>} : vector<8x32xbf16>, vector<32x128xbf16>, vector<8x128xf32> -> vector<8x128xf32>
    %c0_50 = arith.constant 0 : index
    %c0_51 = arith.constant 0 : index
    %182 = vector.load %arg11[%c0_50, %c0_51] : memref<1x128xf32, #tpu.memory_space<vmem>>, vector<1x128xf32>
    %183 = vector.shape_cast %182 : vector<1x128xf32> to vector<128xf32>
    %184 = vector.shape_cast %183 : vector<128xf32> to vector<1x128xf32>
    %185 = vector.broadcast %184 : vector<1x128xf32> to vector<8x128xf32>
    %186 = arith.addf %181, %185 : vector<8x128xf32>
    %cst_52 = arith.constant 0.000000e+00 : f32
    %187 = vector.broadcast %cst_52 : f32 to vector<8x128xf32>
    %188 = arith.maximumf %186, %187 : vector<8x128xf32>
    %189 = arith.truncf %188 : vector<8x128xf32> to vector<8x128xbf16>
    %c0_53 = arith.constant 0 : index
    %c0_54 = arith.constant 0 : index
    %190 = vector.load %arg12[%c0_53, %c0_54] : memref<128x32xbf16, #tpu.memory_space<vmem>>, vector<128x32xbf16>
    %cst_55 = arith.constant dense<0.000000e+00> : vector<8x32xf32>
    %191 = tpu.matmul %189, %190, %cst_55 {dimension_numbers = #tpu.dot_dimension_numbers<[1], [0], [0], [1], [0, 0, 1, 1], [], []>} : vector<8x128xbf16>, vector<128x32xbf16>, vector<8x32xf32> -> vector<8x32xf32>
    %c0_56 = arith.constant 0 : index
    %c0_57 = arith.constant 0 : index
    %192 = vector.load %arg13[%c0_56, %c0_57] : memref<1x32xf32, #tpu.memory_space<vmem>>, vector<1x32xf32>
    %193 = vector.shape_cast %192 : vector<1x32xf32> to vector<32xf32>
    %194 = vector.shape_cast %193 : vector<32xf32> to vector<1x32xf32>
    %195 = vector.broadcast %194 : vector<1x32xf32> to vector<8x32xf32>
    %196 = arith.addf %191, %195 : vector<8x32xf32>
    %197 = arith.addf %150, %196 : vector<8x32xf32>
    %c0_58 = arith.constant 0 : index
    %c0_59 = arith.constant 0 : index
    %c0_60 = arith.constant 0 : index
    %198 = vector.load %arg14[%c0_58, %c0_59, %c0_60] : memref<1x8x32xf32, #tpu.memory_space<vmem>>, vector<1x8x32xf32>
    %199 = vector.shape_cast %198 : vector<1x8x32xf32> to vector<8x32xf32>
    %200 = vector.shape_cast %197 : vector<8x32xf32> to vector<1x8x32xf32>
    tpu.vector_store %arg14[%c0_58, %c0_59, %c0_60], %200 {strides = array<i32>} : memref<1x8x32xf32, #tpu.memory_space<vmem>>, vector<1x8x32xf32>,
    return
  }
  func.func @transform_0(%arg0: i32, %arg1: i32) -> (i32, i32, i32) {
    %c0_i32 = arith.constant 0 : i32
    %c0_i32_0 = arith.constant 0 : i32
    return %arg0, %arg1, %c0_i32 : i32, i32, i32
  }
  func.func @transform_1(%arg0: i32, %arg1: i32) -> (i32, i32) {
    %c0_i32 = arith.constant 0 : i32
    %c0_i32_0 = arith.constant 0 : i32
    %c0_i32_1 = arith.constant 0 : i32
    return %c0_i32, %c0_i32_0 : i32, i32
  }
  func.func @transform_2(%arg0: i32, %arg1: i32) -> (i32, i32) {
    %c0_i32 = arith.constant 0 : i32
    %c0_i32_0 = arith.constant 0 : i32
    %c0_i32_1 = arith.constant 0 : i32
    return %c0_i32, %c0_i32_0 : i32, i32
  }
  func.func @transform_3(%arg0: i32, %arg1: i32) -> (i32, i32) {
    %c0_i32 = arith.constant 0 : i32
    %c0_i32_0 = arith.constant 0 : i32
    %c0_i32_1 = arith.constant 0 : i32
    return %c0_i32, %c0_i32_0 : i32, i32
  }
  func.func @transform_4(%arg0: i32, %arg1: i32) -> (i32, i32) {
    %c0_i32 = arith.constant 0 : i32
    %c0_i32_0 = arith.constant 0 : i32
    %c0_i32_1 = arith.constant 0 : i32
    return %c0_i32, %c0_i32_0 : i32, i32
  }
  func.func @transform_5(%arg0: i32, %arg1: i32) -> (i32, i32) {
    %c0_i32 = arith.constant 0 : i32
    %c0_i32_0 = arith.constant 0 : i32
    %c0_i32_1 = arith.constant 0 : i32
    return %c0_i32, %c0_i32_0 : i32, i32
  }
  func.func @transform_6(%arg0: i32, %arg1: i32) -> (i32, i32) {
    %c0_i32 = arith.constant 0 : i32
    %c0_i32_0 = arith.constant 0 : i32
    %c0_i32_1 = arith.constant 0 : i32
    return %c0_i32, %c0_i32_0 : i32, i32
  }
  func.func @transform_7(%arg0: i32, %arg1: i32) -> (i32, i32) {
    %c0_i32 = arith.constant 0 : i32
    %c0_i32_0 = arith.constant 0 : i32
    %c0_i32_1 = arith.constant 0 : i32
    return %c0_i32, %c0_i32_0 : i32, i32
  }
  func.func @transform_8(%arg0: i32, %arg1: i32) -> (i32, i32) {
    %c0_i32 = arith.constant 0 : i32
    %c0_i32_0 = arith.constant 0 : i32
    %c0_i32_1 = arith.constant 0 : i32
    return %c0_i32, %c0_i32_0 : i32, i32
  }
  func.func @transform_9(%arg0: i32, %arg1: i32) -> (i32, i32) {
    %c0_i32 = arith.constant 0 : i32
    %c0_i32_0 = arith.constant 0 : i32
    %c0_i32_1 = arith.constant 0 : i32
    return %c0_i32, %c0_i32_0 : i32, i32
  }
  func.func @transform_10(%arg0: i32, %arg1: i32) -> (i32, i32) {
    %c0_i32 = arith.constant 0 : i32
    %c0_i32_0 = arith.constant 0 : i32
    %c0_i32_1 = arith.constant 0 : i32
    return %c0_i32, %c0_i32_0 : i32, i32
  }
  func.func @transform_11(%arg0: i32, %arg1: i32) -> (i32, i32) {
    %c0_i32 = arith.constant 0 : i32
    %c0_i32_0 = arith.constant 0 : i32
    %c0_i32_1 = arith.constant 0 : i32
    return %c0_i32, %c0_i32_0 : i32, i32
  }
  func.func @transform_12(%arg0: i32, %arg1: i32) -> (i32, i32, i32) {
    %c0_i32 = arith.constant 0 : i32
    %c0_i32_0 = arith.constant 0 : i32
    return %arg0, %arg1, %c0_i32 : i32, i32, i32
  }
}

</mosaic_0001>

<llo_original>
// kernel: tpu_custom_call.1
$region0: #{tpu_custom_call.1}
  #allocation0 [shape = 'u32[]', space=smem, size = 0x4, offset = 0x4, fixed_abs, tag = 'smem constant byte address 0x4 - core index']
  #allocation1 [shape = 'u32[144,128]{1,0:T(1,128)}', space=vmem, size = 0x12000, scoped, tag = 'internal scratch']
  #allocation2 [shape = 'bf16[4,8,8]{2,1,0:T(8,128)(2,1)}', space=vmem, size = 0x2000, scoped, tag = 'scratch operand']
  #allocation3 [shape = 'bf16[4,8,8]{2,1,0:T(8,128)(2,1)}', space=vmem, size = 0x2000, scoped, tag = 'scratch operand']
  #allocation4 [shape = 'bf16[8,32]{1,0:T(8,128)(2,1)}', space=vmem, size = 0x800, scoped, tag = 'scratch operand']
  %s0 = inlined_call_operand.vmem [shape: f32[2,8,32], index: 0, kind: input, shape index: {}]
  %s1 = inlined_call_operand.vmem [shape: f32[1,32], index: 1, kind: input, shape index: {}]
  %s2 = inlined_call_operand.vmem [shape: f32[1,32], index: 2, kind: input, shape index: {}]
  %s3 = inlined_call_operand.vmem [shape: bf16[32,96], index: 3, kind: input, shape index: {}]
  %s4 = inlined_call_operand.vmem [shape: bf16[32,32], index: 4, kind: input, shape index: {}]
  %s5 = inlined_call_operand.vmem [shape: f32[1,32], index: 5, kind: input, shape index: {}]
  %s6 = inlined_call_operand.vmem [shape: f32[1,32], index: 6, kind: input, shape index: {}]
  %s7 = inlined_call_operand.vmem [shape: f32[1,32], index: 7, kind: input, shape index: {}]
  %s8 = inlined_call_operand.vmem [shape: bf16[32,128], index: 8, kind: input, shape index: {}]
  %s9 = inlined_call_operand.vmem [shape: f32[1,128], index: 9, kind: input, shape index: {}]
  %s10 = inlined_call_operand.vmem [shape: bf16[128,32], index: 10, kind: input, shape index: {}]
  %s11 = inlined_call_operand.vmem [shape: f32[1,32], index: 11, kind: input, shape index: {}]
  %s12 = inlined_call_operand.hbm [shape: f32[2,8,32], index: 12, kind: output, shape index: {}]
  %s13 = sld [smem:[#allocation0]]
  $region88: #{tpu_custom_call.1} parent=0
    _
  %s15 = ssub.s32 1, %s13
  %s16 = scalar_select 0, %s15, %s13
  $region1: #{tpu_custom_call.1} parent=0
    #allocation5 [shape = 'u8[8192]{0}', space=vmem, size = 0x2000, scoped, tag = 'output window, operand 0']
    #allocation6 [shape = 's32[2]{0}', space=sflag, size = 0x8, scoped, tag = 'scoped memory for tpu_custom_call.1']
    %17 = vsyncpa [#allocation6], 0
    %s18 = scalar_lea.sflag [#allocation6], 1
    %19 = vsyncpa %s18, 0
    loop: start=0, step=1, limit=4
    $region2: #{tpu_custom_call.1} parent=1 // loop_pre_header
      _
    $region3: #{tpu_custom_call.1} parent=1 // loop_header
      %s21 = sphi 0, %s25
      %p22 = scmp.ge.s32.totalorder %s21, 4
      %s28 = sphi 0, %s40
      %s29 = sphi 0, %s36
      %s30 = sphi 0, %s28
      %s31 = sphi 0, %s29
      %s32 = sphi 0, %s30
      %s33 = sphi 0, %s31
      %s45 = sphi 0, %s47
      %s48 = sphi 0, %s45
      %s49 = sphi 0, %s48
      %s65 = sphi 0, %s49
      %s69 = sphi 0, %s69
      %s71 = sphi 0, %s69
      %s72 = sphi 0, %s71
      %s86 = sphi 0, %s72
      %s90 = sphi 0, %s90
      %s92 = sphi 0, %s90
      %s93 = sphi 0, %s92
      %s107 = sphi 0, %s93
      %s111 = sphi 0, %s111
      %s113 = sphi 0, %s111
      %s114 = sphi 0, %s113
      %s128 = sphi 0, %s114
      %s132 = sphi 0, %s132
      %s134 = sphi 0, %s132
      %s135 = sphi 0, %s134
      %s149 = sphi 0, %s135
      %s153 = sphi 0, %s153
      %s155 = sphi 0, %s153
      %s156 = sphi 0, %s155
      %s170 = sphi 0, %s156
      %s174 = sphi 0, %s174
      %s176 = sphi 0, %s174
      %s177 = sphi 0, %s176
      %s191 = sphi 0, %s177
      %s195 = sphi 0, %s195
      %s197 = sphi 0, %s195
      %s198 = sphi 0, %s197
      %s212 = sphi 0, %s198
      %s216 = sphi 0, %s216
      %s218 = sphi 0, %s216
      %s219 = sphi 0, %s218
      %s233 = sphi 0, %s219
      %s237 = sphi 0, %s237
      %s239 = sphi 0, %s237
      %s240 = sphi 0, %s239
      %s254 = sphi 0, %s240
      %s258 = sphi 0, %s258
      %s260 = sphi 0, %s258
      %s261 = sphi 0, %s260
      %s275 = sphi 0, %s261
      %s279 = sphi 0, %s279
      %s281 = sphi 0, %s279
      %s282 = sphi 0, %s281
      %s296 = sphi 0, %s282
      %s304 = sphi 0, %s306
      %s307 = sphi 0, %s304
      %s308 = sphi 0, %s307
      %s324 = sphi 0, %s308
    $region4: #{tpu_custom_call.1} parent=1 // loop_header_branch
      %24 = sbr.rel (%p22) target = $region8
    $region5: #{tpu_custom_call.1} parent=1 // loop_body
      %s26 = ssub.s32 %s21, 1
      %s27 = ssub.s32 %s21, 2
      %s34 = sadd.s32 1, %s29
      %p35 = scmp.ge.s32.totalorder %s34, 1
      %s36 = scalar_select %p35, 0, %s34
      %s37 = sadd.s32 1, %s28
      %s38 = scalar_select %p35, %s37, %s28
      %p39 = scmp.ge.s32.totalorder %s38, 2
      %s40 = scalar_select %p39, 0, %s38
      %s41 = ssub.s32 %s28, %s40
      %s42 = ssub.s32 %s29, %s36
      %s43 = sor.u32 %s41, %s42
      %p44 = scmp.eq.s32.totalorder %s43, 0
      %s46 = sadd.s32 %s45, 1
      %s47 = scalar_select %p44, %s45, %s46
      %p50 = pneg %p44
      %p51 = scmp.eq.s32.totalorder %s21, 1
      %p52 = por %p50, %p51
      %p53 = scmp.ne.s32.totalorder %s45, %s48
      %p54 = scmp.eq.s32.totalorder %s21, 0
      %p55 = por %p53, %p54
      %p56 = scmp.ne.s32.totalorder %s45, %s48
      %p57 = scmp.eq.s32.totalorder %s26, 1
      %p58 = por %p56, %p57
      %p59 = scmp.ne.s32.totalorder %s48, %s49
      %p60 = scmp.eq.s32.totalorder %s26, 0
      %p61 = por %p59, %p60
      %p62 = scmp.ne.s32.totalorder %s48, %s49
      %p63 = scmp.eq.s32.totalorder %s27, 1
      %p64 = por %p62, %p63
      %p66 = scmp.ne.s32.totalorder %s49, %s65
      %p67 = scmp.eq.s32.totalorder %s27, 0
      %p68 = por %p66, %p67
      %s70 = sadd.s32 %s69, 1
      %p73 = scmp.eq.s32.totalorder %s21, 1
      %p74 = scmp.ne.s32.totalorder %s69, %s71
      %p75 = scmp.eq.s32.totalorder %s21, 0
      %p76 = por %p74, %p75
      %p77 = scmp.ne.s32.totalorder %s69, %s71
      %p78 = scmp.eq.s32.totalorder %s26, 1
      %p79 = por %p77, %p78
      %p80 = scmp.ne.s32.totalorder %s71, %s72
      %p81 = scmp.eq.s32.totalorder %s26, 0
      %p82 = por %p80, %p81
      %p83 = scmp.ne.s32.totalorder %s71, %s72
      %p84 = scmp.eq.s32.totalorder %s27, 1
      %p85 = por %p83, %p84
      %p87 = scmp.ne.s32.totalorder %s72, %s86
      %p88 = scmp.eq.s32.totalorder %s27, 0
      %p89 = por %p87, %p88
      %s91 = sadd.s32 %s90, 1
      %p94 = scmp.eq.s32.totalorder %s21, 1
      %p95 = scmp.ne.s32.totalorder %s90, %s92
      %p96 = scmp.eq.s32.totalorder %s21, 0
      %p97 = por %p95, %p96
      %p98 = scmp.ne.s32.totalorder %s90, %s92
      %p99 = scmp.eq.s32.totalorder %s26, 1
      %p100 = por %p98, %p99
      %p101 = scmp.ne.s32.totalorder %s92, %s93
      %p102 = scmp.eq.s32.totalorder %s26, 0
      %p103 = por %p101, %p102
      %p104 = scmp.ne.s32.totalorder %s92, %s93
      %p105 = scmp.eq.s32.totalorder %s27, 1
      %p106 = por %p104, %p105
      %p108 = scmp.ne.s32.totalorder %s93, %s107
      %p109 = scmp.eq.s32.totalorder %s27, 0
      %p110 = por %p108, %p109
      %s112 = sadd.s32 %s111, 1
      %p115 = scmp.eq.s32.totalorder %s21, 1
      %p116 = scmp.ne.s32.totalorder %s111, %s113
      %p117 = scmp.eq.s32.totalorder %s21, 0
      %p118 = por %p116, %p117
      %p119 = scmp.ne.s32.totalorder %s111, %s113
      %p120 = scmp.eq.s32.totalorder %s26, 1
      %p121 = por %p119, %p120
      %p122 = scmp.ne.s32.totalorder %s113, %s114
      %p123 = scmp.eq.s32.totalorder %s26, 0
      %p124 = por %p122, %p123
      %p125 = scmp.ne.s32.totalorder %s113, %s114
      %p126 = scmp.eq.s32.totalorder %s27, 1
      %p127 = por %p125, %p126
      %p129 = scmp.ne.s32.totalorder %s114, %s128
      %p130 = scmp.eq.s32.totalorder %s27, 0
      %p131 = por %p129, %p130
      %s133 = sadd.s32 %s132, 1
      %p136 = scmp.eq.s32.totalorder %s21, 1
      %p137 = scmp.ne.s32.totalorder %s132, %s134
      %p138 = scmp.eq.s32.totalorder %s21, 0
      %p139 = por %p137, %p138
      %p140 = scmp.ne.s32.totalorder %s132, %s134
      %p141 = scmp.eq.s32.totalorder %s26, 1
      %p142 = por %p140, %p141
      %p143 = scmp.ne.s32.totalorder %s134, %s135
      %p144 = scmp.eq.s32.totalorder %s26, 0
      %p145 = por %p143, %p144
      %p146 = scmp.ne.s32.totalorder %s134, %s135
      %p147 = scmp.eq.s32.totalorder %s27, 1
      %p148 = por %p146, %p147
      %p150 = scmp.ne.s32.totalorder %s135, %s149
      %p151 = scmp.eq.s32.totalorder %s27, 0
      %p152 = por %p150, %p151
      %s154 = sadd.s32 %s153, 1
      %p157 = scmp.eq.s32.totalorder %s21, 1
      %p158 = scmp.ne.s32.totalorder %s153, %s155
      %p159 = scmp.eq.s32.totalorder %s21, 0
      %p160 = por %p158, %p159
      %p161 = scmp.ne.s32.totalorder %s153, %s155
      %p162 = scmp.eq.s32.totalorder %s26, 1
      %p163 = por %p161, %p162
      %p164 = scmp.ne.s32.totalorder %s155, %s156
      %p165 = scmp.eq.s32.totalorder %s26, 0
      %p166 = por %p164, %p165
      %p167 = scmp.ne.s32.totalorder %s155, %s156
      %p168 = scmp.eq.s32.totalorder %s27, 1
      %p169 = por %p167, %p168
      %p171 = scmp.ne.s32.totalorder %s156, %s170
      %p172 = scmp.eq.s32.totalorder %s27, 0
      %p173 = por %p171, %p172
      %s175 = sadd.s32 %s174, 1
      %p178 = scmp.eq.s32.totalorder %s21, 1
      %p179 = scmp.ne.s32.totalorder %s174, %s176
      %p180 = scmp.eq.s32.totalorder %s21, 0
      %p181 = por %p179, %p180
      %p182 = scmp.ne.s32.totalorder %s174, %s176
      %p183 = scmp.eq.s32.totalorder %s26, 1
      %p184 = por %p182, %p183
      %p185 = scmp.ne.s32.totalorder %s176, %s177
      %p186 = scmp.eq.s32.totalorder %s26, 0
      %p187 = por %p185, %p186
      %p188 = scmp.ne.s32.totalorder %s176, %s177
      %p189 = scmp.eq.s32.totalorder %s27, 1
      %p190 = por %p188, %p189
      %p192 = scmp.ne.s32.totalorder %s177, %s191
      %p193 = scmp.eq.s32.totalorder %s27, 0
      %p194 = por %p192, %p193
      %s196 = sadd.s32 %s195, 1
      %p199 = scmp.eq.s32.totalorder %s21, 1
      %p200 = scmp.ne.s32.totalorder %s195, %s197
      %p201 = scmp.eq.s32.totalorder %s21, 0
      %p202 = por %p200, %p201
      %p203 = scmp.ne.s32.totalorder %s195, %s197
      %p204 = scmp.eq.s32.totalorder %s26, 1
      %p205 = por %p203, %p204
      %p206 = scmp.ne.s32.totalorder %s197, %s198
      %p207 = scmp.eq.s32.totalorder %s26, 0
      %p208 = por %p206, %p207
      %p209 = scmp.ne.s32.totalorder %s197, %s198
      %p210 = scmp.eq.s32.totalorder %s27, 1
      %p211 = por %p209, %p210
      %p213 = scmp.ne.s32.totalorder %s198, %s212
      %p214 = scmp.eq.s32.totalorder %s27, 0
      %p215 = por %p213, %p214
      %s217 = sadd.s32 %s216, 1
      %p220 = scmp.eq.s32.totalorder %s21, 1
      %p221 = scmp.ne.s32.totalorder %s216, %s218
      %p222 = scmp.eq.s32.totalorder %s21, 0
      %p223 = por %p221, %p222
      %p224 = scmp.ne.s32.totalorder %s216, %s218
      %p225 = scmp.eq.s32.totalorder %s26, 1
      %p226 = por %p224, %p225
      %p227 = scmp.ne.s32.totalorder %s218, %s219
      %p228 = scmp.eq.s32.totalorder %s26, 0
      %p229 = por %p227, %p228
      %p230 = scmp.ne.s32.totalorder %s218, %s219
      %p231 = scmp.eq.s32.totalorder %s27, 1
      %p232 = por %p230, %p231
      %p234 = scmp.ne.s32.totalorder %s219, %s233
      %p235 = scmp.eq.s32.totalorder %s27, 0
      %p236 = por %p234, %p235
      %s238 = sadd.s32 %s237, 1
      %p241 = scmp.eq.s32.totalorder %s21, 1
      %p242 = scmp.ne.s32.totalorder %s237, %s239
      %p243 = scmp.eq.s32.totalorder %s21, 0
      %p244 = por %p242, %p243
      %p245 = scmp.ne.s32.totalorder %s237, %s239
      %p246 = scmp.eq.s32.totalorder %s26, 1
      %p247 = por %p245, %p246
      %p248 = scmp.ne.s32.totalorder %s239, %s240
      %p249 = scmp.eq.s32.totalorder %s26, 0
      %p250 = por %p248, %p249
      %p251 = scmp.ne.s32.totalorder %s239, %s240
      %p252 = scmp.eq.s32.totalorder %s27, 1
      %p253 = por %p251, %p252
      %p255 = scmp.ne.s32.totalorder %s240, %s254
      %p256 = scmp.eq.s32.totalorder %s27, 0
      %p257 = por %p255, %p256
      %s259 = sadd.s32 %s258, 1
      %p262 = scmp.eq.s32.totalorder %s21, 1
      %p263 = scmp.ne.s32.totalorder %s258, %s260
      %p264 = scmp.eq.s32.totalorder %s21, 0
      %p265 = por %p263, %p264
      %p266 = scmp.ne.s32.totalorder %s258, %s260
      %p267 = scmp.eq.s32.totalorder %s26, 1
      %p268 = por %p266, %p267
      %p269 = scmp.ne.s32.totalorder %s260, %s261
      %p270 = scmp.eq.s32.totalorder %s26, 0
      %p271 = por %p269, %p270
      %p272 = scmp.ne.s32.totalorder %s260, %s261
      %p273 = scmp.eq.s32.totalorder %s27, 1
      %p274 = por %p272, %p273
      %p276 = scmp.ne.s32.totalorder %s261, %s275
      %p277 = scmp.eq.s32.totalorder %s27, 0
      %p278 = por %p276, %p277
      %s280 = sadd.s32 %s279, 1
      %p283 = scmp.eq.s32.totalorder %s21, 1
      %p284 = scmp.ne.s32.totalorder %s279, %s281
      %p285 = scmp.eq.s32.totalorder %s21, 0
      %p286 = por %p284, %p285
      %p287 = scmp.ne.s32.totalorder %s279, %s281
      %p288 = scmp.eq.s32.totalorder %s26, 1
      %p289 = por %p287, %p288
      %p290 = scmp.ne.s32.totalorder %s281, %s282
      %p291 = scmp.eq.s32.totalorder %s26, 0
      %p292 = por %p290, %p291
      %p293 = scmp.ne.s32.totalorder %s281, %s282
      %p294 = scmp.eq.s32.totalorder %s27, 1
      %p295 = por %p293, %p294
      %p297 = scmp.ne.s32.totalorder %s282, %s296
      %p298 = scmp.eq.s32.totalorder %s27, 0
      %p299 = por %p297, %p298
      %s300 = ssub.s32 %s28, %s40
      %s301 = ssub.s32 %s29, %s36
      %s302 = sor.u32 %s300, %s301
      %p303 = scmp.eq.s32.totalorder %s302, 0
      %s305 = sadd.s32 %s304, 1
      %s306 = scalar_select %p303, %s304, %s305
      %p309 = pneg %p303
      %p310 = scmp.eq.s32.totalorder %s21, 1
      %p311 = por %p309, %p310
      %p312 = scmp.ne.s32.totalorder %s304, %s307
      %p313 = scmp.eq.s32.totalorder %s21, 0
      %p314 = por %p312, %p313
      %p315 = scmp.ne.s32.totalorder %s304, %s307
      %p316 = scmp.eq.s32.totalorder %s26, 1
      %p317 = por %p315, %p316
      %p318 = scmp.ne.s32.totalorder %s307, %s308
      %p319 = scmp.eq.s32.totalorder %s26, 0
      %p320 = por %p318, %p319
      %p321 = scmp.ne.s32.totalorder %s307, %s308
      %p322 = scmp.eq.s32.totalorder %s27, 1
      %p323 = por %p321, %p322
      %p325 = scmp.ne.s32.totalorder %s308, %s324
      %p326 = scmp.eq.s32.totalorder %s27, 0
      %p327 = por %p325, %p326
      %p328 = scmp.le.s32.totalorder 1, %s21
      %p329 = scmp.lt.s32.totalorder %s21, 3
      %p330 = pnand %p328, %p329
      %p331 = pneg %p330
      // Predicated region
      $region9: #{tpu_custom_call.1} parent=5 // pred_check
        _
      $region10: #{tpu_custom_call.1} parent=5 // pred_check_branch
        %333 = sbr.rel (%p330) target = $region12
      $region11: #{tpu_custom_call.1} parent=5 // pred_region
        %s334 = ssub.s32 %s21, 1
        // Predicated region
        $region13: #{tpu_custom_call.1} parent=11 // pred_check
          %p335 = pneg %p82
        $region14: #{tpu_custom_call.1} parent=11 // pred_check_branch
          %337 = sbr.rel (%p335) target = $region16
        $region15: #{tpu_custom_call.1} parent=11 // pred_region
          _
        $region16: #{tpu_custom_call.1} parent=11 // pred_fallthru
          _
        // Predicated region
        $region17: #{tpu_custom_call.1} parent=11 // pred_check
          %p338 = pneg %p103
        $region18: #{tpu_custom_call.1} parent=11 // pred_check_branch
          %340 = sbr.rel (%p338) target = $region20
        $region19: #{tpu_custom_call.1} parent=11 // pred_region
          _
        $region20: #{tpu_custom_call.1} parent=11 // pred_fallthru
          _
        // Predicated region
        $region21: #{tpu_custom_call.1} parent=11 // pred_check
          %p341 = pneg %p124
        $region22: #{tpu_custom_call.1} parent=11 // pred_check_branch
          %343 = sbr.rel (%p341) target = $region24
        $region23: #{tpu_custom_call.1} parent=11 // pred_region
          _
        $region24: #{tpu_custom_call.1} parent=11 // pred_fallthru
          _
        // Predicated region
        $region25: #{tpu_custom_call.1} parent=11 // pred_check
          %p344 = pneg %p145
        $region26: #{tpu_custom_call.1} parent=11 // pred_check_branch
          %346 = sbr.rel (%p344) target = $region28
        $region27: #{tpu_custom_call.1} parent=11 // pred_region
          _
        $region28: #{tpu_custom_call.1} parent=11 // pred_fallthru
          _
        // Predicated region
        $region29: #{tpu_custom_call.1} parent=11 // pred_check
          %p347 = pneg %p166
        $region30: #{tpu_custom_call.1} parent=11 // pred_check_branch
          %349 = sbr.rel (%p347) target = $region32
        $region31: #{tpu_custom_call.1} parent=11 // pred_region
          _
        $region32: #{tpu_custom_call.1} parent=11 // pred_fallthru
          _
        // Predicated region
        $region33: #{tpu_custom_call.1} parent=11 // pred_check
          %p350 = pneg %p187
        $region34: #{tpu_custom_call.1} parent=11 // pred_check_branch
          %352 = sbr.rel (%p350) target = $region36
        $region35: #{tpu_custom_call.1} parent=11 // pred_region
          _
        $region36: #{tpu_custom_call.1} parent=11 // pred_fallthru
          _
        // Predicated region
        $region37: #{tpu_custom_call.1} parent=11 // pred_check
          %p353 = pneg %p208
        $region38: #{tpu_custom_call.1} parent=11 // pred_check_branch
          %355 = sbr.rel (%p353) target = $region40
        $region39: #{tpu_custom_call.1} parent=11 // pred_region
          _
        $region40: #{tpu_custom_call.1} parent=11 // pred_fallthru
          _
        // Predicated region
        $region41: #{tpu_custom_call.1} parent=11 // pred_check
          %p356 = pneg %p229
        $region42: #{tpu_custom_call.1} parent=11 // pred_check_branch
          %358 = sbr.rel (%p356) target = $region44
        $region43: #{tpu_custom_call.1} parent=11 // pred_region
          _
        $region44: #{tpu_custom_call.1} parent=11 // pred_fallthru
          _
        // Predicated region
        $region45: #{tpu_custom_call.1} parent=11 // pred_check
          %p359 = pneg %p250
        $region46: #{tpu_custom_call.1} parent=11 // pred_check_branch
          %361 = sbr.rel (%p359) target = $region48
        $region47: #{tpu_custom_call.1} parent=11 // pred_region
          _
        $region48: #{tpu_custom_call.1} parent=11 // pred_fallthru
          _
        // Predicated region
        $region49: #{tpu_custom_call.1} parent=11 // pred_check
          %p362 = pneg %p271
        $region50: #{tpu_custom_call.1} parent=11 // pred_check_branch
          %364 = sbr.rel (%p362) target = $region52
        $region51: #{tpu_custom_call.1} parent=11 // pred_region
          _
        $region52: #{tpu_custom_call.1} parent=11 // pred_fallthru
          _
        // Predicated region
        $region53: #{tpu_custom_call.1} parent=11 // pred_check
          %p365 = pneg %p292
        $region54: #{tpu_custom_call.1} parent=11 // pred_check_branch
          %367 = sbr.rel (%p365) target = $region56
        $region55: #{tpu_custom_call.1} parent=11 // pred_region
          _
        $region56: #{tpu_custom_call.1} parent=11 // pred_fallthru
          _
      $region12: #{tpu_custom_call.1} parent=5 // pred_fallthru
        _
      %p368 = scmp.lt.s32.totalorder %s21, 2
      // Predicated region
      $region57: #{tpu_custom_call.1} parent=5 // pred_check
        %p369 = pneg %p368
      $region58: #{tpu_custom_call.1} parent=5 // pred_check_branch
        %371 = sbr.rel (%p369) target = $region60
      $region59: #{tpu_custom_call.1} parent=5 // pred_region
        // Predicated region
        $region61: #{tpu_custom_call.1} parent=59 // pred_check
          %p372 = pneg %p55
        $region62: #{tpu_custom_call.1} parent=59 // pred_check_branch
          %374 = sbr.rel (%p372) target = $region64
        $region63: #{tpu_custom_call.1} parent=59 // pred_region
          %p375 = scmp.lt.s32.totalorder %s28, 1
          %s376 = scalar_select %p375, %s28, 1
          %p377 = scmp.lt.s32.totalorder %s29, 0
          %s378 = scalar_select %p377, %s29, 0
          %s379 = sadd.s32 %s378, %s376
          %s380 = smul.addr %s379, 8
          %s381 = scalar_lea.vmem %s0, %s380
        $region64: #{tpu_custom_call.1} parent=59 // pred_fallthru
          _
      $region60: #{tpu_custom_call.1} parent=5 // pred_fallthru
        _
      %p382 = scmp.le.s32.totalorder 1, %s21
      %p383 = scmp.lt.s32.totalorder %s21, 3
      %p384 = pnand %p382, %p383
      %p385 = pneg %p384
      // Predicated region
      $region65: #{tpu_custom_call.1} parent=5 // pred_check
        _
      $region66: #{tpu_custom_call.1} parent=5 // pred_check_branch
        %387 = sbr.rel (%p384) target = $region68
      $region67: #{tpu_custom_call.1} parent=5 // pred_region
        %s388 = ssub.s32 %s21, 1
        %p389 = scmp.lt.s32.totalorder %s30, 1
        %s390 = scalar_select %p389, %s30, 1
        %p391 = scmp.lt.s32.totalorder %s31, 0
        %s392 = scalar_select %p391, %s31, 0
        %s393 = sadd.s32 %s392, %s390
        %s394 = smul.addr %s393, 8
        %s395 = scalar_lea.vmem %s0, %s394
        %p396 = pneg %p61
        %p397 = pneg %p58
        %p398 = pneg %p82
        %p399 = pneg %p79
        %p400 = pneg %p103
        %p401 = pneg %p100
        %p402 = pneg %p124
        %p403 = pneg %p121
        %p404 = pneg %p145
        %p405 = pneg %p142
        %p406 = pneg %p166
        %p407 = pneg %p163
        %p408 = pneg %p187
        %p409 = pneg %p184
        %p410 = pneg %p208
        %p411 = pneg %p205
        %p412 = pneg %p229
        %p413 = pneg %p226
        %p414 = pneg %p250
        %p415 = pneg %p247
        %p416 = pneg %p271
        %p417 = pneg %p268
        %p418 = pneg %p292
        %p419 = pneg %p289
        %p420 = pneg %p320
        %p421 = pneg %p317
        %s422 = sand.u32 %s307, 1
        %s423 = scalar_lea.sflag [#allocation6], %s422
        %s424 = sand.u32 %s307, 1
        %s425 = smul.addr %s424, 8
        %s426 = scalar_lea.vmem [#allocation5], %s425
        %p427 = scmp.lt.s32.totalorder %s30, 1
        %s428 = scalar_select %p427, %s30, 1
        %p429 = scmp.lt.s32.totalorder %s31, 0
        %s430 = scalar_select %p429, %s31, 0
        %s431 = sadd.s32 %s430, %s428
        %s432 = smul.addr %s431, 8
        %s433 = scalar_lea.vmem %s0, %s432
        %s435 = smul.u32 %s31, 8
        %v436 = vld [vmem:[%s433] sm:$0xff]
        %v437 = vld [vmem:[%s1] sm:$0x1]
        %v438 = vld [vmem:[%s2] sm:$0x1]
        %vm439 = vcmask 261120
        %v440 = vsel %vm439, %v436, 0.0
        %441 = vadd.xlane.f32.xlu0 %v440
        %v442 = vpop.xlane.xlu0 %441
        %v443 = vrcp.pop 32.0
        %v444 = vmul.f32 %v442, %v443
        %v445 = vsub.f32 %v436, %v444
        %v446 = vmul.f32 %v445, %v445
        %v447 = vsel %vm439, %v446, 0.0
        %448 = vadd.xlane.f32.xlu0 %v447
        %v449 = vpop.xlane.xlu0 %448
        %v450 = vmul.f32 %v449, %v443
        %v451 = vadd.f32 %v450, 1e-05
        %v452 = vrsqrt.pop %v451
        %v453 = vmul.f32 %v445, %v452
        %v455 = vlaneseq
        %v456 = vshrl.u32 %v455, 7
        %v457 = vsub.s32 0, %v456
        %v458 = vrot.slane %v437, %v457
        %v460 = vmul.f32 %v453, %v458
        %v462 = vlaneseq
        %v463 = vshrl.u32 %v462, 7
        %v464 = vsub.s32 0, %v463
        %v465 = vrot.slane %v438, %v464
        %v467 = vadd.f32 %v460, %v465
        %v468 = vpack.c.bf16 %v467, %v467
        %v469 = vld [vmem:[%s3] sm:$0xf]
        %v470 = vld [vmem:[%s3 + $0x4] sm:$0xf]
        %v471 = vld [vmem:[%s3 + $0x8] sm:$0xf]
        %v472 = vld [vmem:[%s3 + $0xc] sm:$0xf]
        %v477 = vunpack.c.l.b16 %v469
        %v478 = vunpack.c.l.b16 %v470
        %v479 = vunpack.c.l.b16 %v471
        %v480 = vunpack.c.l.b16 %v472
        %v481 = vpack.c.b16 %v478, %v477
        %v482 = vpack.c.b16 %v480, %v479
        %v486 = vsel %vm439, %v468, 0
        %488 = vmatprep.subr.bf16.mxu0 0
        %489 = vmatpush1.bf16.msra.mxu0 0
        %490 = vmatprep.subr.bf16.mxu0 0
        %491 = vmatpush1.bf16.msra.mxu0 0
        %492 = vmatprep.subr.bf16.mxu0 0
        %493 = vmatpush1.bf16.msra.mxu0 0
        %494 = vmatprep.subr.bf16.mxu0 0
        %495 = vmatpush1.bf16.msra.mxu0 0
        %496 = vmatprep.subr.bf16.mxu0 0
        %497 = vmatpush1.bf16.msra.mxu0 0
        %498 = vmatprep.subr.bf16.mxu0 0
        %499 = vmatpush1.bf16.msra.mxu0 0
        %500 = vmatprep.subr.bf16.mxu0 0
        %501 = vmatpush1.bf16.msra.mxu0 %v482
        %502 = vmatprep.subr.bf16.mxu0 0
        %503 = vmatpush1.bf16.msra.mxu0 %v481
        %504 = vmatprep.subr.bf16.mxu0 0
        %505 = vmatpush2.bf16.msra.mxu0 0
        %506 = vmatprep.subr.bf16.mxu0 0
        %507 = vmatpush2.bf16.msra.mxu0 0
        %508 = vmatprep.subr.bf16.mxu0 0
        %509 = vmatpush2.bf16.msra.mxu0 0
        %510 = vmatprep.subr.bf16.mxu0 0
        %511 = vmatpush2.bf16.msra.mxu0 0
        %512 = vmatprep.subr.bf16.mxu0 0
        %513 = vmatpush2.bf16.msra.mxu0 0
        %514 = vmatprep.subr.bf16.mxu0 0
        %515 = vmatpush2.bf16.msra.mxu0 0
        %516 = vmatprep.subr.bf16.mxu0 0
        %517 = vmatpush2.bf16.msra.mxu0 0
        %518 = vmatprep.subr.bf16.mxu0 0
        %519 = vmatpush2.bf16.msra.mxu0 0
        %520 = vmatprep.mubr.bf16.mxu0 0
        %521 = vmatmul.mubr.bf16.gmra.mxu0 %v486
        %v522 = vpop.f32.mrf.mxu0
        %v523 = vadd.f32 0.0, %v522
        %v524 = vpop.f32.mrf.mxu0
        %v525 = vpop.f32.mrf.mxu0
        %v526 = vpop.f32.mrf.mxu0
        %527 = vdwg.mxu0
        %v528 = vmul.f32 %v523, 0.35355338
        %530 = vrot.lane.b32.xlu0 %v528, 120
        %v531 = vpop.permute.xlu0 %530
        %533 = vrot.lane.b32.xlu0 %v528, 112
        %v534 = vpop.permute.xlu0 %533
        %536 = vrot.lane.b32.xlu0 %v528, 104
        %v537 = vpop.permute.xlu0 %536
        %v539 = vpack.c.bf16 %v528, %v528
        %v540 = vpack.c.bf16 %v531, %v531
        %v541 = vpack.c.bf16 %v534, %v534
        %v542 = vpack.c.bf16 %v537, %v537
        %544 = vrot.lane.b32.xlu0 %v523, 120
        %v545 = vpop.permute.xlu0 %544
        %547 = vrot.lane.b32.xlu0 %v523, 112
        %v548 = vpop.permute.xlu0 %547
        %550 = vrot.lane.b32.xlu0 %v523, 104
        %v551 = vpop.permute.xlu0 %550
        %v553 = vpack.c.bf16 %v523, %v523
        %v554 = vpack.c.bf16 %v545, %v545
        %v555 = vpack.c.bf16 %v548, %v548
        %v556 = vpack.c.bf16 %v551, %v551
        %v561 = vunpack.c.l.b16 %v553
        %v562 = vunpack.c.l.b16 %v554
        %v563 = vunpack.c.l.b16 %v555
        %v564 = vunpack.c.l.b16 %v556
        %v565 = vpack.c.b16 %v561, %v561
        %v566 = vpack.c.b16 %v562, %v562
        %v567 = vpack.c.b16 %v563, %v563
        %v568 = vpack.c.b16 %v564, %v564
        %569 = vrot.lane.b32.xlu0 %v565, 96
        %v570 = vpop.permute.xlu0 %569
        %571 = vrot.lane.b32.xlu0 %v566, 96
        %v572 = vpop.permute.xlu0 %571
        %573 = vrot.lane.b32.xlu0 %v567, 96
        %v574 = vpop.permute.xlu0 %573
        %575 = vrot.lane.b32.xlu0 %v568, 96
        %v576 = vpop.permute.xlu0 %575
        %s581 = sshra.s32 %s435, 3
        %s582 = sand.u32 %s435, 7
        %s583 = smul.addr %s581, 4
        %s584 = scalar_lea.vmem [#allocation2], %s583
        %vm585 = vcmask 60416
        %586 = vst.msk [vmem:[%s584] sm:$0xf] %vm585, %v570
        %587 = vst.msk [vmem:[%s584 + $0x4] sm:$0xf] %vm585, %v572
        %588 = vst.msk [vmem:[%s584 + $0x8] sm:$0xf] %vm585, %v574
        %589 = vst.msk [vmem:[%s584 + $0xc] sm:$0xf] %vm585, %v576
        %590 = vrot.lane.b32.xlu0 %v565, 64
        %v591 = vpop.permute.xlu0 %590
        %592 = vrot.lane.b32.xlu0 %v566, 64
        %v593 = vpop.permute.xlu0 %592
        %594 = vrot.lane.b32.xlu0 %v567, 64
        %v595 = vpop.permute.xlu0 %594
        %596 = vrot.lane.b32.xlu0 %v568, 64
        %v597 = vpop.permute.xlu0 %596
        %s602 = smul.addr %s581, 4
        %s603 = scalar_lea.vmem [#allocation3], %s602
        %604 = vst.msk [vmem:[%s603] sm:$0xf] %vm585, %v591
        %605 = vst.msk [vmem:[%s603 + $0x4] sm:$0xf] %vm585, %v593
        %606 = vst.msk [vmem:[%s603 + $0x8] sm:$0xf] %vm585, %v595
        %607 = vst.msk [vmem:[%s603 + $0xc] sm:$0xf] %vm585, %v597
        // While loop
        $region69: #{tpu_custom_call.1} parent=67 // loop_pre_header
          _
        $region70: #{tpu_custom_call.1} parent=67 // loop_header
          %s609 = sphi 0, %s611
          %p610 = scmp.ge.s32.totalorder %s609, %s31
          %v614 = vphi -inf, %v838
          %v615 = vphi -inf, %v839
          %v616 = vphi -inf, %v840
          %v617 = vphi -inf, %v841
          %v618 = vphi 0.0, %v882
          %v619 = vphi 0.0, %v883
          %v620 = vphi 0.0, %v884
          %v621 = vphi 0.0, %v885
          %v622 = vphi 0.0, %v1079
          %v623 = vphi 0.0, %v1080
          %v624 = vphi 0.0, %v1081
          %v625 = vphi 0.0, %v1082
        $region71: #{tpu_custom_call.1} parent=67 // loop_header_branch
          %613 = sbr.rel (%p610) target = $region75
        $region72: #{tpu_custom_call.1} parent=67 // loop_body
          %s626 = smul.u32 %s609, 8
          %s627 = sshra.s32 %s626, 3
          %s628 = sand.u32 %s626, 7
          %s629 = smul.addr %s627, 4
          %s630 = scalar_lea.vmem [#allocation2], %s629
          %v631 = vld [vmem:[%s630] sm:$0xf]
          %v632 = vld [vmem:[%s630 + $0x4] sm:$0xf]
          %v633 = vld [vmem:[%s630 + $0x8] sm:$0xf]
          %v634 = vld [vmem:[%s630 + $0xc] sm:$0xf]
          %s635 = smul.addr %s627, 4
          %s636 = scalar_lea.vmem [#allocation3], %s635
          %v637 = vld [vmem:[%s636] sm:$0xf]
          %v638 = vld [vmem:[%s636 + $0x4] sm:$0xf]
          %v639 = vld [vmem:[%s636 + $0x8] sm:$0xf]
          %v640 = vld [vmem:[%s636 + $0xc] sm:$0xf]
          %vm641 = vcmask 64512
          %v643 = vsel %vm641, %v539, 0
          %v646 = vsel %vm641, %v631, 0
          %648 = vmatprep.subr.bf16.mxu0 0
          %649 = vmatpush1.bf16.xpose.msra.mxu0 0
          %650 = vmatprep.subr.bf16.mxu0 0
          %651 = vmatpush1.bf16.xpose.msra.mxu0 0
          %652 = vmatprep.subr.bf16.mxu0 0
          %653 = vmatpush1.bf16.xpose.msra.mxu0 0
          %654 = vmatprep.subr.bf16.mxu0 0
          %655 = vmatpush1.bf16.xpose.msra.mxu0 0
          %656 = vmatprep.subr.bf16.mxu0 0
          %657 = vmatpush1.bf16.xpose.msra.mxu0 0
          %658 = vmatprep.subr.bf16.mxu0 0
          %659 = vmatpush1.bf16.xpose.msra.mxu0 0
          %660 = vmatprep.subr.bf16.mxu0 0
          %661 = vmatpush1.bf16.xpose.msra.mxu0 0
          %662 = vmatprep.subr.bf16.mxu0 0
          %663 = vmatpush1.bf16.xpose.msra.mxu0 %v646
          %664 = vmatprep.subr.bf16.mxu0 0
          %665 = vmatpush2.bf16.xpose.msra.mxu0 0
          %666 = vmatprep.subr.bf16.mxu0 0
          %667 = vmatpush2.bf16.xpose.msra.mxu0 0
          %668 = vmatprep.subr.bf16.mxu0 0
          %669 = vmatpush2.bf16.xpose.msra.mxu0 0
          %670 = vmatprep.subr.bf16.mxu0 0
          %671 = vmatpush2.bf16.xpose.msra.mxu0 0
          %672 = vmatprep.subr.bf16.mxu0 0
          %673 = vmatpush2.bf16.xpose.msra.mxu0 0
          %674 = vmatprep.subr.bf16.mxu0 0
          %675 = vmatpush2.bf16.xpose.msra.mxu0 0
          %676 = vmatprep.subr.bf16.mxu0 0
          %677 = vmatpush2.bf16.xpose.msra.mxu0 0
          %678 = vmatprep.subr.bf16.mxu0 0
          %679 = vmatpush2.bf16.xpose.msra.mxu0 0
          %680 = vmatprep.mubr.bf16.mxu0 0
          %681 = vmatmul.mubr.bf16.gmra.mxu0 %v643
          %v682 = vpop.f32.mrf.mxu0
          %v683 = vadd.f32 0.0, %v682
          %v684 = vpop.f32.mrf.mxu0
          %v685 = vpop.f32.mrf.mxu0
          %v686 = vpop.f32.mrf.mxu0
          %687 = vdwg.mxu0
          %v689 = vsel %vm641, %v540, 0
          %v692 = vsel %vm641, %v632, 0
          %694 = vmatprep.subr.bf16.mxu0 0
          %695 = vmatpush1.bf16.xpose.msra.mxu0 0
          %696 = vmatprep.subr.bf16.mxu0 0
          %697 = vmatpush1.bf16.xpose.msra.mxu0 0
          %698 = vmatprep.subr.bf16.mxu0 0
          %699 = vmatpush1.bf16.xpose.msra.mxu0 0
          %700 = vmatprep.subr.bf16.mxu0 0
          %701 = vmatpush1.bf16.xpose.msra.mxu0 0
          %702 = vmatprep.subr.bf16.mxu0 0
          %703 = vmatpush1.bf16.xpose.msra.mxu0 0
          %704 = vmatprep.subr.bf16.mxu0 0
          %705 = vmatpush1.bf16.xpose.msra.mxu0 0
          %706 = vmatprep.subr.bf16.mxu0 0
          %707 = vmatpush1.bf16.xpose.msra.mxu0 0
          %708 = vmatprep.subr.bf16.mxu0 0
          %709 = vmatpush1.bf16.xpose.msra.mxu0 %v692
          %710 = vmatprep.subr.bf16.mxu0 0
          %711 = vmatpush2.bf16.xpose.msra.mxu0 0
          %712 = vmatprep.subr.bf16.mxu0 0
          %713 = vmatpush2.bf16.xpose.msra.mxu0 0
          %714 = vmatprep.subr.bf16.mxu0 0
          %715 = vmatpush2.bf16.xpose.msra.mxu0 0
          %716 = vmatprep.subr.bf16.mxu0 0
          %717 = vmatpush2.bf16.xpose.msra.mxu0 0
          %718 = vmatprep.subr.bf16.mxu0 0
          %719 = vmatpush2.bf16.xpose.msra.mxu0 0
          %720 = vmatprep.subr.bf16.mxu0 0
          %721 = vmatpush2.bf16.xpose.msra.mxu0 0
          %722 = vmatprep.subr.bf16.mxu0 0
          %723 = vmatpush2.bf16.xpose.msra.mxu0 0
          %724 = vmatprep.subr.bf16.mxu0 0
          %725 = vmatpush2.bf16.xpose.msra.mxu0 0
          %726 = vmatprep.mubr.bf16.mxu0 0
          %727 = vmatmul.mubr.bf16.gmra.mxu0 %v689
          %v728 = vpop.f32.mrf.mxu0
          %v729 = vadd.f32 0.0, %v728
          %v730 = vpop.f32.mrf.mxu0
          %v731 = vpop.f32.mrf.mxu0
          %v732 = vpop.f32.mrf.mxu0
          %733 = vdwg.mxu0
          %v735 = vsel %vm641, %v541, 0
          %v738 = vsel %vm641, %v633, 0
          %740 = vmatprep.subr.bf16.mxu0 0
          %741 = vmatpush1.bf16.xpose.msra.mxu0 0
          %742 = vmatprep.subr.bf16.mxu0 0
          %743 = vmatpush1.bf16.xpose.msra.mxu0 0
          %744 = vmatprep.subr.bf16.mxu0 0
          %745 = vmatpush1.bf16.xpose.msra.mxu0 0
          %746 = vmatprep.subr.bf16.mxu0 0
          %747 = vmatpush1.bf16.xpose.msra.mxu0 0
          %748 = vmatprep.subr.bf16.mxu0 0
          %749 = vmatpush1.bf16.xpose.msra.mxu0 0
          %750 = vmatprep.subr.bf16.mxu0 0
          %751 = vmatpush1.bf16.xpose.msra.mxu0 0
          %752 = vmatprep.subr.bf16.mxu0 0
          %753 = vmatpush1.bf16.xpose.msra.mxu0 0
          %754 = vmatprep.subr.bf16.mxu0 0
          %755 = vmatpush1.bf16.xpose.msra.mxu0 %v738
          %756 = vmatprep.subr.bf16.mxu0 0
          %757 = vmatpush2.bf16.xpose.msra.mxu0 0
          %758 = vmatprep.subr.bf16.mxu0 0
          %759 = vmatpush2.bf16.xpose.msra.mxu0 0
          %760 = vmatprep.subr.bf16.mxu0 0
          %761 = vmatpush2.bf16.xpose.msra.mxu0 0
          %762 = vmatprep.subr.bf16.mxu0 0
          %763 = vmatpush2.bf16.xpose.msra.mxu0 0
          %764 = vmatprep.subr.bf16.mxu0 0
          %765 = vmatpush2.bf16.xpose.msra.mxu0 0
          %766 = vmatprep.subr.bf16.mxu0 0
          %767 = vmatpush2.bf16.xpose.msra.mxu0 0
          %768 = vmatprep.subr.bf16.mxu0 0
          %769 = vmatpush2.bf16.xpose.msra.mxu0 0
          %770 = vmatprep.subr.bf16.mxu0 0
          %771 = vmatpush2.bf16.xpose.msra.mxu0 0
          %772 = vmatprep.mubr.bf16.mxu0 0
          %773 = vmatmul.mubr.bf16.gmra.mxu0 %v735
          %v774 = vpop.f32.mrf.mxu0
          %v775 = vadd.f32 0.0, %v774
          %v776 = vpop.f32.mrf.mxu0
          %v777 = vpop.f32.mrf.mxu0
          %v778 = vpop.f32.mrf.mxu0
          %779 = vdwg.mxu0
          %v781 = vsel %vm641, %v542, 0
          %v784 = vsel %vm641, %v634, 0
          %786 = vmatprep.subr.bf16.mxu0 0
          %787 = vmatpush1.bf16.xpose.msra.mxu0 0
          %788 = vmatprep.subr.bf16.mxu0 0
          %789 = vmatpush1.bf16.xpose.msra.mxu0 0
          %790 = vmatprep.subr.bf16.mxu0 0
          %791 = vmatpush1.bf16.xpose.msra.mxu0 0
          %792 = vmatprep.subr.bf16.mxu0 0
          %793 = vmatpush1.bf16.xpose.msra.mxu0 0
          %794 = vmatprep.subr.bf16.mxu0 0
          %795 = vmatpush1.bf16.xpose.msra.mxu0 0
          %796 = vmatprep.subr.bf16.mxu0 0
          %797 = vmatpush1.bf16.xpose.msra.mxu0 0
          %798 = vmatprep.subr.bf16.mxu0 0
          %799 = vmatpush1.bf16.xpose.msra.mxu0 0
          %800 = vmatprep.subr.bf16.mxu0 0
          %801 = vmatpush1.bf16.xpose.msra.mxu0 %v784
          %802 = vmatprep.subr.bf16.mxu0 0
          %803 = vmatpush2.bf16.xpose.msra.mxu0 0
          %804 = vmatprep.subr.bf16.mxu0 0
          %805 = vmatpush2.bf16.xpose.msra.mxu0 0
          %806 = vmatprep.subr.bf16.mxu0 0
          %807 = vmatpush2.bf16.xpose.msra.mxu0 0
          %808 = vmatprep.subr.bf16.mxu0 0
          %809 = vmatpush2.bf16.xpose.msra.mxu0 0
          %810 = vmatprep.subr.bf16.mxu0 0
          %811 = vmatpush2.bf16.xpose.msra.mxu0 0
          %812 = vmatprep.subr.bf16.mxu0 0
          %813 = vmatpush2.bf16.xpose.msra.mxu0 0
          %814 = vmatprep.subr.bf16.mxu0 0
          %815 = vmatpush2.bf16.xpose.msra.mxu0 0
          %816 = vmatprep.subr.bf16.mxu0 0
          %817 = vmatpush2.bf16.xpose.msra.mxu0 0
          %818 = vmatprep.mubr.bf16.mxu0 0
          %819 = vmatmul.mubr.bf16.gmra.mxu0 %v781
          %v820 = vpop.f32.mrf.mxu0
          %v821 = vadd.f32 0.0, %v820
          %v822 = vpop.f32.mrf.mxu0
          %v823 = vpop.f32.mrf.mxu0
          %v824 = vpop.f32.mrf.mxu0
          %825 = vdwg.mxu0
          %v826 = vsel %vm641, %v683, -inf
          %827 = vmax.xlane.f32.xlu0 %v826
          %v828 = vpop.xlane.xlu0 %827
          %v829 = vsel %vm641, %v729, -inf
          %830 = vmax.xlane.f32.xlu0 %v829
          %v831 = vpop.xlane.xlu0 %830
          %v832 = vsel %vm641, %v775, -inf
          %833 = vmax.xlane.f32.xlu0 %v832
          %v834 = vpop.xlane.xlu0 %833
          %v835 = vsel %vm641, %v821, -inf
          %836 = vmax.xlane.f32.xlu0 %v835
          %v837 = vpop.xlane.xlu0 %836
          %v838 = vmax.f32 %v614, %v828
          %v839 = vmax.f32 %v615, %v831
          %v840 = vmax.f32 %v616, %v834
          %v841 = vmax.f32 %v617, %v837
          %v842 = vsub.f32 %v614, %v838
          %v843 = vsub.f32 %v615, %v839
          %v844 = vsub.f32 %v616, %v840
          %v845 = vsub.f32 %v617, %v841
          %v846 = vmul.f32 %v842, 1.442695
          %v847 = vpow.pop %v846
          %v848 = vmul.f32 %v843, 1.442695
          %v849 = vpow.pop %v848
          %v850 = vmul.f32 %v844, 1.442695
          %v851 = vpow.pop %v850
          %v852 = vmul.f32 %v845, 1.442695
          %v853 = vpow.pop %v852
          %v854 = vsub.f32 %v683, %v838
          %v855 = vsub.f32 %v729, %v839
          %v856 = vsub.f32 %v775, %v840
          %v857 = vsub.f32 %v821, %v841
          %v858 = vmul.f32 %v854, 1.442695
          %v859 = vpow.pop %v858
          %v860 = vmul.f32 %v855, 1.442695
          %v861 = vpow.pop %v860
          %v862 = vmul.f32 %v856, 1.442695
          %v863 = vpow.pop %v862
          %v864 = vmul.f32 %v857, 1.442695
          %v865 = vpow.pop %v864
          %v866 = vmul.f32 %v847, %v618
          %v867 = vmul.f32 %v849, %v619
          %v868 = vmul.f32 %v851, %v620
          %v869 = vmul.f32 %v853, %v621
          %v870 = vsel %vm641, %v859, 0.0
          %871 = vadd.xlane.f32.xlu0 %v870
          %v872 = vpop.xlane.xlu0 %871
          %v873 = vsel %vm641, %v861, 0.0
          %874 = vadd.xlane.f32.xlu0 %v873
          %v875 = vpop.xlane.xlu0 %874
          %v876 = vsel %vm641, %v863, 0.0
          %877 = vadd.xlane.f32.xlu0 %v876
          %v878 = vpop.xlane.xlu0 %877
          %v879 = vsel %vm641, %v865, 0.0
          %880 = vadd.xlane.f32.xlu0 %v879
          %v881 = vpop.xlane.xlu0 %880
          %v882 = vadd.f32 %v866, %v872
          %v883 = vadd.f32 %v867, %v875
          %v884 = vadd.f32 %v868, %v878
          %v885 = vadd.f32 %v869, %v881
          %v886 = vpack.c.bf16 %v859, %v859
          %v887 = vpack.c.bf16 %v861, %v861
          %v888 = vpack.c.bf16 %v863, %v863
          %v889 = vpack.c.bf16 %v865, %v865
          %v891 = vsel %vm641, %v886, 0
          %vm893 = vcmask 1043456
          %v895 = vsel %vm893, %v637, 0
          %897 = vmatprep.subr.bf16.mxu0 0
          %898 = vmatpush1.bf16.msra.mxu0 0
          %899 = vmatprep.subr.bf16.mxu0 0
          %900 = vmatpush1.bf16.msra.mxu0 0
          %901 = vmatprep.subr.bf16.mxu0 0
          %902 = vmatpush1.bf16.msra.mxu0 0
          %903 = vmatprep.subr.bf16.mxu0 0
          %904 = vmatpush1.bf16.msra.mxu0 0
          %905 = vmatprep.subr.bf16.mxu0 0
          %906 = vmatpush1.bf16.msra.mxu0 0
          %907 = vmatprep.subr.bf16.mxu0 0
          %908 = vmatpush1.bf16.msra.mxu0 0
          %909 = vmatprep.subr.bf16.mxu0 0
          %910 = vmatpush1.bf16.msra.mxu0 0
          %911 = vmatprep.subr.bf16.mxu0 0
          %912 = vmatpush1.bf16.msra.mxu0 %v895
          %913 = vmatprep.subr.bf16.mxu0 0
          %914 = vmatpush2.bf16.msra.mxu0 0
          %915 = vmatprep.subr.bf16.mxu0 0
          %916 = vmatpush2.bf16.msra.mxu0 0
          %917 = vmatprep.subr.bf16.mxu0 0
          %918 = vmatpush2.bf16.msra.mxu0 0
          %919 = vmatprep.subr.bf16.mxu0 0
          %920 = vmatpush2.bf16.msra.mxu0 0
          %921 = vmatprep.subr.bf16.mxu0 0
          %922 = vmatpush2.bf16.msra.mxu0 0
          %923 = vmatprep.subr.bf16.mxu0 0
          %924 = vmatpush2.bf16.msra.mxu0 0
          %925 = vmatprep.subr.bf16.mxu0 0
          %926 = vmatpush2.bf16.msra.mxu0 0
          %927 = vmatprep.subr.bf16.mxu0 0
          %928 = vmatpush2.bf16.msra.mxu0 0
          %929 = vmatprep.mubr.bf16.mxu0 0
          %930 = vmatmul.mubr.bf16.gmra.mxu0 %v891
          %v931 = vpop.f32.mrf.mxu0
          %v932 = vadd.f32 0.0, %v931
          %v933 = vpop.f32.mrf.mxu0
          %v934 = vpop.f32.mrf.mxu0
          %v935 = vpop.f32.mrf.mxu0
          %936 = vdwg.mxu0
          %v938 = vsel %vm641, %v887, 0
          %v941 = vsel %vm893, %v638, 0
          %943 = vmatprep.subr.bf16.mxu0 0
          %944 = vmatpush1.bf16.msra.mxu0 0
          %945 = vmatprep.subr.bf16.mxu0 0
          %946 = vmatpush1.bf16.msra.mxu0 0
          %947 = vmatprep.subr.bf16.mxu0 0
          %948 = vmatpush1.bf16.msra.mxu0 0
          %949 = vmatprep.subr.bf16.mxu0 0
          %950 = vmatpush1.bf16.msra.mxu0 0
          %951 = vmatprep.subr.bf16.mxu0 0
          %952 = vmatpush1.bf16.msra.mxu0 0
          %953 = vmatprep.subr.bf16.mxu0 0
          %954 = vmatpush1.bf16.msra.mxu0 0
          %955 = vmatprep.subr.bf16.mxu0 0
          %956 = vmatpush1.bf16.msra.mxu0 0
          %957 = vmatprep.subr.bf16.mxu0 0
          %958 = vmatpush1.bf16.msra.mxu0 %v941
          %959 = vmatprep.subr.bf16.mxu0 0
          %960 = vmatpush2.bf16.msra.mxu0 0
          %961 = vmatprep.subr.bf16.mxu0 0
          %962 = vmatpush2.bf16.msra.mxu0 0
          %963 = vmatprep.subr.bf16.mxu0 0
          %964 = vmatpush2.bf16.msra.mxu0 0
          %965 = vmatprep.subr.bf16.mxu0 0
          %966 = vmatpush2.bf16.msra.mxu0 0
          %967 = vmatprep.subr.bf16.mxu0 0
          %968 = vmatpush2.bf16.msra.mxu0 0
          %969 = vmatprep.subr.bf16.mxu0 0
          %970 = vmatpush2.bf16.msra.mxu0 0
          %971 = vmatprep.subr.bf16.mxu0 0
          %972 = vmatpush2.bf16.msra.mxu0 0
          %973 = vmatprep.subr.bf16.mxu0 0
          %974 = vmatpush2.bf16.msra.mxu0 0
          %975 = vmatprep.mubr.bf16.mxu0 0
          %976 = vmatmul.mubr.bf16.gmra.mxu0 %v938
          %v977 = vpop.f32.mrf.mxu0
          %v978 = vadd.f32 0.0, %v977
          %v979 = vpop.f32.mrf.mxu0
          %v980 = vpop.f32.mrf.mxu0
          %v981 = vpop.f32.mrf.mxu0
          %982 = vdwg.mxu0
          %v984 = vsel %vm641, %v888, 0
          %v987 = vsel %vm893, %v639, 0
          %989 = vmatprep.subr.bf16.mxu0 0
          %990 = vmatpush1.bf16.msra.mxu0 0
          %991 = vmatprep.subr.bf16.mxu0 0
          %992 = vmatpush1.bf16.msra.mxu0 0
          %993 = vmatprep.subr.bf16.mxu0 0
          %994 = vmatpush1.bf16.msra.mxu0 0
          %995 = vmatprep.subr.bf16.mxu0 0
          %996 = vmatpush1.bf16.msra.mxu0 0
          %997 = vmatprep.subr.bf16.mxu0 0
          %998 = vmatpush1.bf16.msra.mxu0 0
          %999 = vmatprep.subr.bf16.mxu0 0
          %1000 = vmatpush1.bf16.msra.mxu0 0
          %1001 = vmatprep.subr.bf16.mxu0 0
          %1002 = vmatpush1.bf16.msra.mxu0 0
          %1003 = vmatprep.subr.bf16.mxu0 0
          %1004 = vmatpush1.bf16.msra.mxu0 %v987
          %1005 = vmatprep.subr.bf16.mxu0 0
          %1006 = vmatpush2.bf16.msra.mxu0 0
          %1007 = vmatprep.subr.bf16.mxu0 0
          %1008 = vmatpush2.bf16.msra.mxu0 0
          %1009 = vmatprep.subr.bf16.mxu0 0
          %1010 = vmatpush2.bf16.msra.mxu0 0
          %1011 = vmatprep.subr.bf16.mxu0 0
          %1012 = vmatpush2.bf16.msra.mxu0 0
          %1013 = vmatprep.subr.bf16.mxu0 0
          %1014 = vmatpush2.bf16.msra.mxu0 0
          %1015 = vmatprep.subr.bf16.mxu0 0
          %1016 = vmatpush2.bf16.msra.mxu0 0
          %1017 = vmatprep.subr.bf16.mxu0 0
          %1018 = vmatpush2.bf16.msra.mxu0 0
          %1019 = vmatprep.subr.bf16.mxu0 0
          %1020 = vmatpush2.bf16.msra.mxu0 0
          %1021 = vmatprep.mubr.bf16.mxu0 0
          %1022 = vmatmul.mubr.bf16.gmra.mxu0 %v984
          %v1023 = vpop.f32.mrf.mxu0
          %v1024 = vadd.f32 0.0, %v1023
          %v1025 = vpop.f32.mrf.mxu0
          %v1026 = vpop.f32.mrf.mxu0
          %v1027 = vpop.f32.mrf.mxu0
          %1028 = vdwg.mxu0
          %v1030 = vsel %vm641, %v889, 0
          %v1033 = vsel %vm893, %v640, 0
          %1035 = vmatprep.subr.bf16.mxu0 0
          %1036 = vmatpush1.bf16.msra.mxu0 0
          %1037 = vmatprep.subr.bf16.mxu0 0
          %1038 = vmatpush1.bf16.msra.mxu0 0
          %1039 = vmatprep.subr.bf16.mxu0 0
          %1040 = vmatpush1.bf16.msra.mxu0 0
          %1041 = vmatprep.subr.bf16.mxu0 0
          %1042 = vmatpush1.bf16.msra.mxu0 0
          %1043 = vmatprep.subr.bf16.mxu0 0
          %1044 = vmatpush1.bf16.msra.mxu0 0
          %1045 = vmatprep.subr.bf16.mxu0 0
          %1046 = vmatpush1.bf16.msra.mxu0 0
          %1047 = vmatprep.subr.bf16.mxu0 0
          %1048 = vmatpush1.bf16.msra.mxu0 0
          %1049 = vmatprep.subr.bf16.mxu0 0
          %1050 = vmatpush1.bf16.msra.mxu0 %v1033
          %1051 = vmatprep.subr.bf16.mxu0 0
          %1052 = vmatpush2.bf16.msra.mxu0 0
          %1053 = vmatprep.subr.bf16.mxu0 0
          %1054 = vmatpush2.bf16.msra.mxu0 0
          %1055 = vmatprep.subr.bf16.mxu0 0
          %1056 = vmatpush2.bf16.msra.mxu0 0
          %1057 = vmatprep.subr.bf16.mxu0 0
          %1058 = vmatpush2.bf16.msra.mxu0 0
          %1059 = vmatprep.subr.bf16.mxu0 0
          %1060 = vmatpush2.bf16.msra.mxu0 0
          %1061 = vmatprep.subr.bf16.mxu0 0
          %1062 = vmatpush2.bf16.msra.mxu0 0
          %1063 = vmatprep.subr.bf16.mxu0 0
          %1064 = vmatpush2.bf16.msra.mxu0 0
          %1065 = vmatprep.subr.bf16.mxu0 0
          %1066 = vmatpush2.bf16.msra.mxu0 0
          %1067 = vmatprep.mubr.bf16.mxu0 0
          %1068 = vmatmul.mubr.bf16.gmra.mxu0 %v1030
          %v1069 = vpop.f32.mrf.mxu0
          %v1070 = vadd.f32 0.0, %v1069
          %v1071 = vpop.f32.mrf.mxu0
          %v1072 = vpop.f32.mrf.mxu0
          %v1073 = vpop.f32.mrf.mxu0
          %1074 = vdwg.mxu0
          %v1075 = vmul.f32 %v847, %v622
          %v1076 = vmul.f32 %v849, %v623
          %v1077 = vmul.f32 %v851, %v624
          %v1078 = vmul.f32 %v853, %v625
          %v1079 = vadd.f32 %v1075, %v932
          %v1080 = vadd.f32 %v1076, %v978
          %v1081 = vadd.f32 %v1077, %v1024
          %v1082 = vadd.f32 %v1078, %v1070
        $region73: #{tpu_custom_call.1} parent=67 // loop_footer
          %s611 = sadd.s32 %s609, 1
        $region74: #{tpu_custom_call.1} parent=67 // loop_footer_branch
          %608 = sbr.rel target = $region70
        $region75: #{tpu_custom_call.1} parent=67 // loop_exit
          _
        %v1083 = vlaneseq
        %v1084 = vshrl.u32 %v1083, 7
        %v1085 = vlaneseq
        %v1086 = vand.u32 %v1085, 127
        %1087 = vrot.lane.b32.xlu0 %v553, 96
        %v1088 = vpop.permute.xlu0 %1087
        %vm1089 = vcmask 64512
        %v1091 = vsel %vm1089, %v539, 0
        %v1094 = vsel %vm1089, %v1088, 0
        %1096 = vmatprep.subr.bf16.mxu0 0
        %1097 = vmatpush1.bf16.xpose.msra.mxu0 0
        %1098 = vmatprep.subr.bf16.mxu0 0
        %1099 = vmatpush1.bf16.xpose.msra.mxu0 0
        %1100 = vmatprep.subr.bf16.mxu0 0
        %1101 = vmatpush1.bf16.xpose.msra.mxu0 0
        %1102 = vmatprep.subr.bf16.mxu0 0
        %1103 = vmatpush1.bf16.xpose.msra.mxu0 0
        %1104 = vmatprep.subr.bf16.mxu0 0
        %1105 = vmatpush1.bf16.xpose.msra.mxu0 0
        %1106 = vmatprep.subr.bf16.mxu0 0
        %1107 = vmatpush1.bf16.xpose.msra.mxu0 0
        %1108 = vmatprep.subr.bf16.mxu0 0
        %1109 = vmatpush1.bf16.xpose.msra.mxu0 0
        %1110 = vmatprep.subr.bf16.mxu0 0
        %1111 = vmatpush1.bf16.xpose.msra.mxu0 %v1094
        %1112 = vmatprep.subr.bf16.mxu0 0
        %1113 = vmatpush2.bf16.xpose.msra.mxu0 0
        %1114 = vmatprep.subr.bf16.mxu0 0
        %1115 = vmatpush2.bf16.xpose.msra.mxu0 0
        %1116 = vmatprep.subr.bf16.mxu0 0
        %1117 = vmatpush2.bf16.xpose.msra.mxu0 0
        %1118 = vmatprep.subr.bf16.mxu0 0
        %1119 = vmatpush2.bf16.xpose.msra.mxu0 0
        %1120 = vmatprep.subr.bf16.mxu0 0
        %1121 = vmatpush2.bf16.xpose.msra.mxu0 0
        %1122 = vmatprep.subr.bf16.mxu0 0
        %1123 = vmatpush2.bf16.xpose.msra.mxu0 0
        %1124 = vmatprep.subr.bf16.mxu0 0
        %1125 = vmatpush2.bf16.xpose.msra.mxu0 0
        %1126 = vmatprep.subr.bf16.mxu0 0
        %1127 = vmatpush2.bf16.xpose.msra.mxu0 0
        %1128 = vmatprep.mubr.bf16.mxu0 0
        %1129 = vmatmul.mubr.bf16.gmra.mxu0 %v1091
        %v1130 = vpop.f32.mrf.mxu0
        %v1131 = vadd.f32 0.0, %v1130
        %v1132 = vpop.f32.mrf.mxu0
        %v1133 = vpop.f32.mrf.mxu0
        %v1134 = vpop.f32.mrf.mxu0
        %1135 = vdwg.mxu0
        %1136 = vrot.lane.b32.xlu0 %v554, 96
        %v1137 = vpop.permute.xlu0 %1136
        %v1139 = vsel %vm1089, %v540, 0
        %v1142 = vsel %vm1089, %v1137, 0
        %1144 = vmatprep.subr.bf16.mxu0 0
        %1145 = vmatpush1.bf16.xpose.msra.mxu0 0
        %1146 = vmatprep.subr.bf16.mxu0 0
        %1147 = vmatpush1.bf16.xpose.msra.mxu0 0
        %1148 = vmatprep.subr.bf16.mxu0 0
        %1149 = vmatpush1.bf16.xpose.msra.mxu0 0
        %1150 = vmatprep.subr.bf16.mxu0 0
        %1151 = vmatpush1.bf16.xpose.msra.mxu0 0
        %1152 = vmatprep.subr.bf16.mxu0 0
        %1153 = vmatpush1.bf16.xpose.msra.mxu0 0
        %1154 = vmatprep.subr.bf16.mxu0 0
        %1155 = vmatpush1.bf16.xpose.msra.mxu0 0
        %1156 = vmatprep.subr.bf16.mxu0 0
        %1157 = vmatpush1.bf16.xpose.msra.mxu0 0
        %1158 = vmatprep.subr.bf16.mxu0 0
        %1159 = vmatpush1.bf16.xpose.msra.mxu0 %v1142
        %1160 = vmatprep.subr.bf16.mxu0 0
        %1161 = vmatpush2.bf16.xpose.msra.mxu0 0
        %1162 = vmatprep.subr.bf16.mxu0 0
        %1163 = vmatpush2.bf16.xpose.msra.mxu0 0
        %1164 = vmatprep.subr.bf16.mxu0 0
        %1165 = vmatpush2.bf16.xpose.msra.mxu0 0
        %1166 = vmatprep.subr.bf16.mxu0 0
        %1167 = vmatpush2.bf16.xpose.msra.mxu0 0
        %1168 = vmatprep.subr.bf16.mxu0 0
        %1169 = vmatpush2.bf16.xpose.msra.mxu0 0
        %1170 = vmatprep.subr.bf16.mxu0 0
        %1171 = vmatpush2.bf16.xpose.msra.mxu0 0
        %1172 = vmatprep.subr.bf16.mxu0 0
        %1173 = vmatpush2.bf16.xpose.msra.mxu0 0
        %1174 = vmatprep.subr.bf16.mxu0 0
        %1175 = vmatpush2.bf16.xpose.msra.mxu0 0
        %1176 = vmatprep.mubr.bf16.mxu0 0
        %1177 = vmatmul.mubr.bf16.gmra.mxu0 %v1139
        %v1178 = vpop.f32.mrf.mxu0
        %v1179 = vadd.f32 0.0, %v1178
        %v1180 = vpop.f32.mrf.mxu0
        %v1181 = vpop.f32.mrf.mxu0
        %v1182 = vpop.f32.mrf.mxu0
        %1183 = vdwg.mxu0
        %1184 = vrot.lane.b32.xlu0 %v555, 96
        %v1185 = vpop.permute.xlu0 %1184
        %v1187 = vsel %vm1089, %v541, 0
        %v1190 = vsel %vm1089, %v1185, 0
        %1192 = vmatprep.subr.bf16.mxu0 0
        %1193 = vmatpush1.bf16.xpose.msra.mxu0 0
        %1194 = vmatprep.subr.bf16.mxu0 0
        %1195 = vmatpush1.bf16.xpose.msra.mxu0 0
        %1196 = vmatprep.subr.bf16.mxu0 0
        %1197 = vmatpush1.bf16.xpose.msra.mxu0 0
        %1198 = vmatprep.subr.bf16.mxu0 0
        %1199 = vmatpush1.bf16.xpose.msra.mxu0 0
        %1200 = vmatprep.subr.bf16.mxu0 0
        %1201 = vmatpush1.bf16.xpose.msra.mxu0 0
        %1202 = vmatprep.subr.bf16.mxu0 0
        %1203 = vmatpush1.bf16.xpose.msra.mxu0 0
        %1204 = vmatprep.subr.bf16.mxu0 0
        %1205 = vmatpush1.bf16.xpose.msra.mxu0 0
        %1206 = vmatprep.subr.bf16.mxu0 0
        %1207 = vmatpush1.bf16.xpose.msra.mxu0 %v1190
        %1208 = vmatprep.subr.bf16.mxu0 0
        %1209 = vmatpush2.bf16.xpose.msra.mxu0 0
        %1210 = vmatprep.subr.bf16.mxu0 0
        %1211 = vmatpush2.bf16.xpose.msra.mxu0 0
        %1212 = vmatprep.subr.bf16.mxu0 0
        %1213 = vmatpush2.bf16.xpose.msra.mxu0 0
        %1214 = vmatprep.subr.bf16.mxu0 0
        %1215 = vmatpush2.bf16.xpose.msra.mxu0 0
        %1216 = vmatprep.subr.bf16.mxu0 0
        %1217 = vmatpush2.bf16.xpose.msra.mxu0 0
        %1218 = vmatprep.subr.bf16.mxu0 0
        %1219 = vmatpush2.bf16.xpose.msra.mxu0 0
        %1220 = vmatprep.subr.bf16.mxu0 0
        %1221 = vmatpush2.bf16.xpose.msra.mxu0 0
        %1222 = vmatprep.subr.bf16.mxu0 0
        %1223 = vmatpush2.bf16.xpose.msra.mxu0 0
        %1224 = vmatprep.mubr.bf16.mxu0 0
        %1225 = vmatmul.mubr.bf16.gmra.mxu0 %v1187
        %v1226 = vpop.f32.mrf.mxu0
        %v1227 = vadd.f32 0.0, %v1226
        %v1228 = vpop.f32.mrf.mxu0
        %v1229 = vpop.f32.mrf.mxu0
        %v1230 = vpop.f32.mrf.mxu0
        %1231 = vdwg.mxu0
        %1232 = vrot.lane.b32.xlu0 %v556, 96
        %v1233 = vpop.permute.xlu0 %1232
        %v1235 = vsel %vm1089, %v542, 0
        %v1238 = vsel %vm1089, %v1233, 0
        %1240 = vmatprep.subr.bf16.mxu0 0
        %1241 = vmatpush1.bf16.xpose.msra.mxu0 0
        %1242 = vmatprep.subr.bf16.mxu0 0
        %1243 = vmatpush1.bf16.xpose.msra.mxu0 0
        %1244 = vmatprep.subr.bf16.mxu0 0
        %1245 = vmatpush1.bf16.xpose.msra.mxu0 0
        %1246 = vmatprep.subr.bf16.mxu0 0
        %1247 = vmatpush1.bf16.xpose.msra.mxu0 0
        %1248 = vmatprep.subr.bf16.mxu0 0
        %1249 = vmatpush1.bf16.xpose.msra.mxu0 0
        %1250 = vmatprep.subr.bf16.mxu0 0
        %1251 = vmatpush1.bf16.xpose.msra.mxu0 0
        %1252 = vmatprep.subr.bf16.mxu0 0
        %1253 = vmatpush1.bf16.xpose.msra.mxu0 0
        %1254 = vmatprep.subr.bf16.mxu0 0
        %1255 = vmatpush1.bf16.xpose.msra.mxu0 %v1238
        %1256 = vmatprep.subr.bf16.mxu0 0
        %1257 = vmatpush2.bf16.xpose.msra.mxu0 0
        %1258 = vmatprep.subr.bf16.mxu0 0
        %1259 = vmatpush2.bf16.xpose.msra.mxu0 0
        %1260 = vmatprep.subr.bf16.mxu0 0
        %1261 = vmatpush2.bf16.xpose.msra.mxu0 0
        %1262 = vmatprep.subr.bf16.mxu0 0
        %1263 = vmatpush2.bf16.xpose.msra.mxu0 0
        %1264 = vmatprep.subr.bf16.mxu0 0
        %1265 = vmatpush2.bf16.xpose.msra.mxu0 0
        %1266 = vmatprep.subr.bf16.mxu0 0
        %1267 = vmatpush2.bf16.xpose.msra.mxu0 0
        %1268 = vmatprep.subr.bf16.mxu0 0
        %1269 = vmatpush2.bf16.xpose.msra.mxu0 0
        %1270 = vmatprep.subr.bf16.mxu0 0
        %1271 = vmatpush2.bf16.xpose.msra.mxu0 0
        %1272 = vmatprep.mubr.bf16.mxu0 0
        %1273 = vmatmul.mubr.bf16.gmra.mxu0 %v1235
        %v1274 = vpop.f32.mrf.mxu0
        %v1275 = vadd.f32 0.0, %v1274
        %v1276 = vpop.f32.mrf.mxu0
        %v1277 = vpop.f32.mrf.mxu0
        %v1278 = vpop.f32.mrf.mxu0
        %1279 = vdwg.mxu0
        %vm1280 = vcmp.le.s32.totalorder %v1086, %v1084
        %v1281 = vsel %vm1280, 1, 0
        %vm1282 = vcmp.eq.s32.totalorder %v1281, 1
        %v1283 = vsel %vm1282, %v1131, -1e+30
        %v1284 = vsel %vm1282, %v1179, -1e+30
        %v1285 = vsel %vm1282, %v1227, -1e+30
        %v1286 = vsel %vm1282, %v1275, -1e+30
        %v1287 = vsel %vm1089, %v1283, -inf
        %1288 = vmax.xlane.f32.xlu0 %v1287
        %v1289 = vpop.xlane.xlu0 %1288
        %v1290 = vsel %vm1089, %v1284, -inf
        %1291 = vmax.xlane.f32.xlu0 %v1290
        %v1292 = vpop.xlane.xlu0 %1291
        %v1293 = vsel %vm1089, %v1285, -inf
        %1294 = vmax.xlane.f32.xlu0 %v1293
        %v1295 = vpop.xlane.xlu0 %1294
        %v1296 = vsel %vm1089, %v1286, -inf
        %1297 = vmax.xlane.f32.xlu0 %v1296
        %v1298 = vpop.xlane.xlu0 %1297
        %v1299 = vmax.f32 %v614, %v1289
        %v1300 = vmax.f32 %v615, %v1292
        %v1301 = vmax.f32 %v616, %v1295
        %v1302 = vmax.f32 %v617, %v1298
        %v1303 = vsub.f32 %v614, %v1299
        %v1304 = vsub.f32 %v615, %v1300
        %v1305 = vsub.f32 %v616, %v1301
        %v1306 = vsub.f32 %v617, %v1302
        %v1307 = vmul.f32 %v1303, 1.442695
        %v1308 = vpow.pop %v1307
        %v1309 = vmul.f32 %v1304, 1.442695
        %v1310 = vpow.pop %v1309
        %v1311 = vmul.f32 %v1305, 1.442695
        %v1312 = vpow.pop %v1311
        %v1313 = vmul.f32 %v1306, 1.442695
        %v1314 = vpow.pop %v1313
        %v1315 = vsub.f32 %v1283, %v1299
        %v1316 = vsub.f32 %v1284, %v1300
        %v1317 = vsub.f32 %v1285, %v1301
        %v1318 = vsub.f32 %v1286, %v1302
        %v1319 = vmul.f32 %v1315, 1.442695
        %v1320 = vpow.pop %v1319
        %v1321 = vmul.f32 %v1316, 1.442695
        %v1322 = vpow.pop %v1321
        %v1323 = vmul.f32 %v1317, 1.442695
        %v1324 = vpow.pop %v1323
        %v1325 = vmul.f32 %v1318, 1.442695
        %v1326 = vpow.pop %v1325
        %v1327 = vmul.f32 %v1308, %v618
        %v1328 = vmul.f32 %v1310, %v619
        %v1329 = vmul.f32 %v1312, %v620
        %v1330 = vmul.f32 %v1314, %v621
        %v1331 = vsel %vm1089, %v1320, 0.0
        %1332 = vadd.xlane.f32.xlu0 %v1331
        %v1333 = vpop.xlane.xlu0 %1332
        %v1334 = vsel %vm1089, %v1322, 0.0
        %1335 = vadd.xlane.f32.xlu0 %v1334
        %v1336 = vpop.xlane.xlu0 %1335
        %v1337 = vsel %vm1089, %v1324, 0.0
        %1338 = vadd.xlane.f32.xlu0 %v1337
        %v1339 = vpop.xlane.xlu0 %1338
        %v1340 = vsel %vm1089, %v1326, 0.0
        %1341 = vadd.xlane.f32.xlu0 %v1340
        %v1342 = vpop.xlane.xlu0 %1341
        %v1343 = vadd.f32 %v1327, %v1333
        %v1344 = vadd.f32 %v1328, %v1336
        %v1345 = vadd.f32 %v1329, %v1339
        %v1346 = vadd.f32 %v1330, %v1342
        %v1347 = vpack.c.bf16 %v1320, %v1320
        %v1348 = vpack.c.bf16 %v1322, %v1322
        %v1349 = vpack.c.bf16 %v1324, %v1324
        %v1350 = vpack.c.bf16 %v1326, %v1326
        %1351 = vrot.lane.b32.xlu0 %v553, 64
        %v1352 = vpop.permute.xlu0 %1351
        %v1354 = vsel %vm1089, %v1347, 0
        %vm1356 = vcmask 1043456
        %v1358 = vsel %vm1356, %v1352, 0
        %1360 = vmatprep.subr.bf16.mxu0 0
        %1361 = vmatpush1.bf16.msra.mxu0 0
        %1362 = vmatprep.subr.bf16.mxu0 0
        %1363 = vmatpush1.bf16.msra.mxu0 0
        %1364 = vmatprep.subr.bf16.mxu0 0
        %1365 = vmatpush1.bf16.msra.mxu0 0
        %1366 = vmatprep.subr.bf16.mxu0 0
        %1367 = vmatpush1.bf16.msra.mxu0 0
        %1368 = vmatprep.subr.bf16.mxu0 0
        %1369 = vmatpush1.bf16.msra.mxu0 0
        %1370 = vmatprep.subr.bf16.mxu0 0
        %1371 = vmatpush1.bf16.msra.mxu0 0
        %1372 = vmatprep.subr.bf16.mxu0 0
        %1373 = vmatpush1.bf16.msra.mxu0 0
        %1374 = vmatprep.subr.bf16.mxu0 0
        %1375 = vmatpush1.bf16.msra.mxu0 %v1358
        %1376 = vmatprep.subr.bf16.mxu0 0
        %1377 = vmatpush2.bf16.msra.mxu0 0
        %1378 = vmatprep.subr.bf16.mxu0 0
        %1379 = vmatpush2.bf16.msra.mxu0 0
        %1380 = vmatprep.subr.bf16.mxu0 0
        %1381 = vmatpush2.bf16.msra.mxu0 0
        %1382 = vmatprep.subr.bf16.mxu0 0
        %1383 = vmatpush2.bf16.msra.mxu0 0
        %1384 = vmatprep.subr.bf16.mxu0 0
        %1385 = vmatpush2.bf16.msra.mxu0 0
        %1386 = vmatprep.subr.bf16.mxu0 0
        %1387 = vmatpush2.bf16.msra.mxu0 0
        %1388 = vmatprep.subr.bf16.mxu0 0
        %1389 = vmatpush2.bf16.msra.mxu0 0
        %1390 = vmatprep.subr.bf16.mxu0 0
        %1391 = vmatpush2.bf16.msra.mxu0 0
        %1392 = vmatprep.mubr.bf16.mxu0 0
        %1393 = vmatmul.mubr.bf16.gmra.mxu0 %v1354
        %v1394 = vpop.f32.mrf.mxu0
        %v1395 = vadd.f32 0.0, %v1394
        %v1396 = vpop.f32.mrf.mxu0
        %v1397 = vpop.f32.mrf.mxu0
        %v1398 = vpop.f32.mrf.mxu0
        %1399 = vdwg.mxu0
        %1400 = vrot.lane.b32.xlu0 %v554, 64
        %v1401 = vpop.permute.xlu0 %1400
        %v1403 = vsel %vm1089, %v1348, 0
        %v1406 = vsel %vm1356, %v1401, 0
        %1408 = vmatprep.subr.bf16.mxu0 0
        %1409 = vmatpush1.bf16.msra.mxu0 0
        %1410 = vmatprep.subr.bf16.mxu0 0
        %1411 = vmatpush1.bf16.msra.mxu0 0
        %1412 = vmatprep.subr.bf16.mxu0 0
        %1413 = vmatpush1.bf16.msra.mxu0 0
        %1414 = vmatprep.subr.bf16.mxu0 0
        %1415 = vmatpush1.bf16.msra.mxu0 0
        %1416 = vmatprep.subr.bf16.mxu0 0
        %1417 = vmatpush1.bf16.msra.mxu0 0
        %1418 = vmatprep.subr.bf16.mxu0 0
        %1419 = vmatpush1.bf16.msra.mxu0 0
        %1420 = vmatprep.subr.bf16.mxu0 0
        %1421 = vmatpush1.bf16.msra.mxu0 0
        %1422 = vmatprep.subr.bf16.mxu0 0
        %1423 = vmatpush1.bf16.msra.mxu0 %v1406
        %1424 = vmatprep.subr.bf16.mxu0 0
        %1425 = vmatpush2.bf16.msra.mxu0 0
        %1426 = vmatprep.subr.bf16.mxu0 0
        %1427 = vmatpush2.bf16.msra.mxu0 0
        %1428 = vmatprep.subr.bf16.mxu0 0
        %1429 = vmatpush2.bf16.msra.mxu0 0
        %1430 = vmatprep.subr.bf16.mxu0 0
        %1431 = vmatpush2.bf16.msra.mxu0 0
        %1432 = vmatprep.subr.bf16.mxu0 0
        %1433 = vmatpush2.bf16.msra.mxu0 0
        %1434 = vmatprep.subr.bf16.mxu0 0
        %1435 = vmatpush2.bf16.msra.mxu0 0
        %1436 = vmatprep.subr.bf16.mxu0 0
        %1437 = vmatpush2.bf16.msra.mxu0 0
        %1438 = vmatprep.subr.bf16.mxu0 0
        %1439 = vmatpush2.bf16.msra.mxu0 0
        %1440 = vmatprep.mubr.bf16.mxu0 0
        %1441 = vmatmul.mubr.bf16.gmra.mxu0 %v1403
        %v1442 = vpop.f32.mrf.mxu0
        %v1443 = vadd.f32 0.0, %v1442
        %v1444 = vpop.f32.mrf.mxu0
        %v1445 = vpop.f32.mrf.mxu0
        %v1446 = vpop.f32.mrf.mxu0
        %1447 = vdwg.mxu0
        %1448 = vrot.lane.b32.xlu0 %v555, 64
        %v1449 = vpop.permute.xlu0 %1448
        %v1451 = vsel %vm1089, %v1349, 0
        %v1454 = vsel %vm1356, %v1449, 0
        %1456 = vmatprep.subr.bf16.mxu0 0
        %1457 = vmatpush1.bf16.msra.mxu0 0
        %1458 = vmatprep.subr.bf16.mxu0 0
        %1459 = vmatpush1.bf16.msra.mxu0 0
        %1460 = vmatprep.subr.bf16.mxu0 0
        %1461 = vmatpush1.bf16.msra.mxu0 0
        %1462 = vmatprep.subr.bf16.mxu0 0
        %1463 = vmatpush1.bf16.msra.mxu0 0
        %1464 = vmatprep.subr.bf16.mxu0 0
        %1465 = vmatpush1.bf16.msra.mxu0 0
        %1466 = vmatprep.subr.bf16.mxu0 0
        %1467 = vmatpush1.bf16.msra.mxu0 0
        %1468 = vmatprep.subr.bf16.mxu0 0
        %1469 = vmatpush1.bf16.msra.mxu0 0
        %1470 = vmatprep.subr.bf16.mxu0 0
        %1471 = vmatpush1.bf16.msra.mxu0 %v1454
        %1472 = vmatprep.subr.bf16.mxu0 0
        %1473 = vmatpush2.bf16.msra.mxu0 0
        %1474 = vmatprep.subr.bf16.mxu0 0
        %1475 = vmatpush2.bf16.msra.mxu0 0
        %1476 = vmatprep.subr.bf16.mxu0 0
        %1477 = vmatpush2.bf16.msra.mxu0 0
        %1478 = vmatprep.subr.bf16.mxu0 0
        %1479 = vmatpush2.bf16.msra.mxu0 0
        %1480 = vmatprep.subr.bf16.mxu0 0
        %1481 = vmatpush2.bf16.msra.mxu0 0
        %1482 = vmatprep.subr.bf16.mxu0 0
        %1483 = vmatpush2.bf16.msra.mxu0 0
        %1484 = vmatprep.subr.bf16.mxu0 0
        %1485 = vmatpush2.bf16.msra.mxu0 0
        %1486 = vmatprep.subr.bf16.mxu0 0
        %1487 = vmatpush2.bf16.msra.mxu0 0
        %1488 = vmatprep.mubr.bf16.mxu0 0
        %1489 = vmatmul.mubr.bf16.gmra.mxu0 %v1451
        %v1490 = vpop.f32.mrf.mxu0
        %v1491 = vadd.f32 0.0, %v1490
        %v1492 = vpop.f32.mrf.mxu0
        %v1493 = vpop.f32.mrf.mxu0
        %v1494 = vpop.f32.mrf.mxu0
        %1495 = vdwg.mxu0
        %1496 = vrot.lane.b32.xlu0 %v556, 64
        %v1497 = vpop.permute.xlu0 %1496
        %v1499 = vsel %vm1089, %v1350, 0
        %v1502 = vsel %vm1356, %v1497, 0
        %1504 = vmatprep.subr.bf16.mxu0 0
        %1505 = vmatpush1.bf16.msra.mxu0 0
        %1506 = vmatprep.subr.bf16.mxu0 0
        %1507 = vmatpush1.bf16.msra.mxu0 0
        %1508 = vmatprep.subr.bf16.mxu0 0
        %1509 = vmatpush1.bf16.msra.mxu0 0
        %1510 = vmatprep.subr.bf16.mxu0 0
        %1511 = vmatpush1.bf16.msra.mxu0 0
        %1512 = vmatprep.subr.bf16.mxu0 0
        %1513 = vmatpush1.bf16.msra.mxu0 0
        %1514 = vmatprep.subr.bf16.mxu0 0
        %1515 = vmatpush1.bf16.msra.mxu0 0
        %1516 = vmatprep.subr.bf16.mxu0 0
        %1517 = vmatpush1.bf16.msra.mxu0 0
        %1518 = vmatprep.subr.bf16.mxu0 0
        %1519 = vmatpush1.bf16.msra.mxu0 %v1502
        %1520 = vmatprep.subr.bf16.mxu0 0
        %1521 = vmatpush2.bf16.msra.mxu0 0
        %1522 = vmatprep.subr.bf16.mxu0 0
        %1523 = vmatpush2.bf16.msra.mxu0 0
        %1524 = vmatprep.subr.bf16.mxu0 0
        %1525 = vmatpush2.bf16.msra.mxu0 0
        %1526 = vmatprep.subr.bf16.mxu0 0
        %1527 = vmatpush2.bf16.msra.mxu0 0
        %1528 = vmatprep.subr.bf16.mxu0 0
        %1529 = vmatpush2.bf16.msra.mxu0 0
        %1530 = vmatprep.subr.bf16.mxu0 0
        %1531 = vmatpush2.bf16.msra.mxu0 0
        %1532 = vmatprep.subr.bf16.mxu0 0
        %1533 = vmatpush2.bf16.msra.mxu0 0
        %1534 = vmatprep.subr.bf16.mxu0 0
        %1535 = vmatpush2.bf16.msra.mxu0 0
        %1536 = vmatprep.mubr.bf16.mxu0 0
        %1537 = vmatmul.mubr.bf16.gmra.mxu0 %v1499
        %v1538 = vpop.f32.mrf.mxu0
        %v1539 = vadd.f32 0.0, %v1538
        %v1540 = vpop.f32.mrf.mxu0
        %v1541 = vpop.f32.mrf.mxu0
        %v1542 = vpop.f32.mrf.mxu0
        %1543 = vdwg.mxu0
        %v1544 = vmul.f32 %v1308, %v622
        %v1545 = vmul.f32 %v1310, %v623
        %v1546 = vmul.f32 %v1312, %v624
        %v1547 = vmul.f32 %v1314, %v625
        %v1548 = vadd.f32 %v1544, %v1395
        %v1549 = vadd.f32 %v1545, %v1443
        %v1550 = vadd.f32 %v1546, %v1491
        %v1551 = vadd.f32 %v1547, %v1539
        %v1552 = vrcp.pop %v1343
        %v1553 = vmul.f32 %v1548, %v1552
        %v1554 = vpack.c.bf16 %v1553, %v1553
        %1555 = vst.msk [vmem:[#allocation4] sm:$0xf] %vm585, %v1554
        %v1556 = vrcp.pop %v1344
        %v1557 = vmul.f32 %v1549, %v1556
        %v1558 = vpack.c.bf16 %v1557, %v1557
        %v1560 = vunpack.c.l.b16 %v1558
        %v1561 = vpack.c.b16 %v1560, %v1560
        %1562 = vrot.lane.b32.xlu0 %v1561, 8
        %v1563 = vpop.permute.xlu0 %1562
        %vm1565 = vcmask 126016
        %1566 = vst.msk [vmem:[#allocation4] sm:$0xf] %vm1565, %v1563
        %v1567 = vrcp.pop %v1345
        %v1568 = vmul.f32 %v1550, %v1567
        %v1569 = vpack.c.bf16 %v1568, %v1568
        %v1571 = vunpack.c.l.b16 %v1569
        %v1572 = vpack.c.b16 %v1571, %v1571
        %1573 = vrot.lane.b32.xlu0 %v1572, 16
        %v1574 = vpop.permute.xlu0 %1573
        %vm1576 = vcmask 191616
        %1577 = vst.msk [vmem:[#allocation4] sm:$0xf] %vm1576, %v1574
        %v1578 = vrcp.pop %v1346
        %v1579 = vmul.f32 %v1551, %v1578
        %v1580 = vpack.c.bf16 %v1579, %v1579
        %v1582 = vunpack.c.l.b16 %v1580
        %v1583 = vpack.c.b16 %v1582, %v1582
        %1584 = vrot.lane.b32.xlu0 %v1583, 24
        %v1585 = vpop.permute.xlu0 %1584
        %vm1587 = vcmask 257216
        %1588 = vst.msk [vmem:[#allocation4] sm:$0xf] %vm1587, %v1585
        %v1589 = vld [vmem:[#allocation4] sm:$0xf]
        %v1590 = vld [vmem:[%s4] sm:$0xf]
        %v1591 = vld [vmem:[%s4 + $0x4] sm:$0xf]
        %v1592 = vld [vmem:[%s4 + $0x8] sm:$0xf]
        %v1593 = vld [vmem:[%s4 + $0xc] sm:$0xf]
        %v1598 = vunpack.c.l.b16 %v1590
        %v1599 = vunpack.c.l.b16 %v1591
        %v1600 = vunpack.c.l.b16 %v1592
        %v1601 = vunpack.c.l.b16 %v1593
        %v1602 = vpack.c.b16 %v1599, %v1598
        %v1603 = vpack.c.b16 %v1601, %v1600
        %v1607 = vsel %vm439, %v1589, 0
        %1609 = vmatprep.subr.bf16.mxu0 0
        %1610 = vmatpush1.bf16.msra.mxu0 0
        %1611 = vmatprep.subr.bf16.mxu0 0
        %1612 = vmatpush1.bf16.msra.mxu0 0
        %1613 = vmatprep.subr.bf16.mxu0 0
        %1614 = vmatpush1.bf16.msra.mxu0 0
        %1615 = vmatprep.subr.bf16.mxu0 0
        %1616 = vmatpush1.bf16.msra.mxu0 0
        %1617 = vmatprep.subr.bf16.mxu0 0
        %1618 = vmatpush1.bf16.msra.mxu0 0
        %1619 = vmatprep.subr.bf16.mxu0 0
        %1620 = vmatpush1.bf16.msra.mxu0 0
        %1621 = vmatprep.subr.bf16.mxu0 0
        %1622 = vmatpush1.bf16.msra.mxu0 %v1603
        %1623 = vmatprep.subr.bf16.mxu0 0
        %1624 = vmatpush1.bf16.msra.mxu0 %v1602
        %1625 = vmatprep.subr.bf16.mxu0 0
        %1626 = vmatpush2.bf16.msra.mxu0 0
        %1627 = vmatprep.subr.bf16.mxu0 0
        %1628 = vmatpush2.bf16.msra.mxu0 0
        %1629 = vmatprep.subr.bf16.mxu0 0
        %1630 = vmatpush2.bf16.msra.mxu0 0
        %1631 = vmatprep.subr.bf16.mxu0 0
        %1632 = vmatpush2.bf16.msra.mxu0 0
        %1633 = vmatprep.subr.bf16.mxu0 0
        %1634 = vmatpush2.bf16.msra.mxu0 0
        %1635 = vmatprep.subr.bf16.mxu0 0
        %1636 = vmatpush2.bf16.msra.mxu0 0
        %1637 = vmatprep.subr.bf16.mxu0 0
        %1638 = vmatpush2.bf16.msra.mxu0 0
        %1639 = vmatprep.subr.bf16.mxu0 0
        %1640 = vmatpush2.bf16.msra.mxu0 0
        %1641 = vmatprep.mubr.bf16.mxu0 0
        %1642 = vmatmul.mubr.bf16.gmra.mxu0 %v1607
        %v1643 = vpop.f32.mrf.mxu0
        %v1644 = vadd.f32 0.0, %v1643
        %v1645 = vpop.f32.mrf.mxu0
        %v1646 = vpop.f32.mrf.mxu0
        %v1647 = vpop.f32.mrf.mxu0
        %1648 = vdwg.mxu0
        %v1649 = vadd.f32 %v436, %v1644
        %v1650 = vld [vmem:[%s5] sm:$0x1]
        %v1652 = vlaneseq
        %v1653 = vshrl.u32 %v1652, 7
        %v1654 = vsub.s32 0, %v1653
        %v1655 = vrot.slane %v1650, %v1654
        %v1657 = vadd.f32 %v1649, %v1655
        %v1658 = vld [vmem:[%s6] sm:$0x1]
        %v1659 = vld [vmem:[%s7] sm:$0x1]
        %v1660 = vsel %vm439, %v1657, 0.0
        %1661 = vadd.xlane.f32.xlu0 %v1660
        %v1662 = vpop.xlane.xlu0 %1661
        %v1663 = vmul.f32 %v1662, %v443
        %v1664 = vsub.f32 %v1657, %v1663
        %v1665 = vmul.f32 %v1664, %v1664
        %v1666 = vsel %vm439, %v1665, 0.0
        %1667 = vadd.xlane.f32.xlu0 %v1666
        %v1668 = vpop.xlane.xlu0 %1667
        %v1669 = vmul.f32 %v1668, %v443
        %v1670 = vadd.f32 %v1669, 1e-05
        %v1671 = vrsqrt.pop %v1670
        %v1672 = vmul.f32 %v1664, %v1671
        %v1674 = vlaneseq
        %v1675 = vshrl.u32 %v1674, 7
        %v1676 = vsub.s32 0, %v1675
        %v1677 = vrot.slane %v1658, %v1676
        %v1679 = vmul.f32 %v1672, %v1677
        %v1681 = vlaneseq
        %v1682 = vshrl.u32 %v1681, 7
        %v1683 = vsub.s32 0, %v1682
        %v1684 = vrot.slane %v1659, %v1683
        %v1686 = vadd.f32 %v1679, %v1684
        %v1687 = vpack.c.bf16 %v1686, %v1686
        %v1688 = vld [vmem:[%s8] sm:$0xf]
        %v1689 = vld [vmem:[%s8 + $0x4] sm:$0xf]
        %v1690 = vld [vmem:[%s8 + $0x8] sm:$0xf]
        %v1691 = vld [vmem:[%s8 + $0xc] sm:$0xf]
        %v1692 = vld [vmem:[%s9] sm:$0x1]
        %v1694 = vlaneseq
        %v1695 = vshrl.u32 %v1694, 7
        %v1696 = vsub.s32 0, %v1695
        %v1697 = vrot.slane %v1692, %v1696
        %v1703 = vunpack.c.l.b16 %v1688
        %v1704 = vunpack.c.l.b16 %v1689
        %v1705 = vunpack.c.l.b16 %v1690
        %v1706 = vunpack.c.l.b16 %v1691
        %v1707 = vpack.c.b16 %v1704, %v1703
        %v1708 = vpack.c.b16 %v1706, %v1705
        %v1712 = vsel %vm439, %v1687, 0
        %1714 = vmatprep.subr.bf16.mxu0 0
        %1715 = vmatpush1.bf16.msra.mxu0 0
        %1716 = vmatprep.subr.bf16.mxu0 0
        %1717 = vmatpush1.bf16.msra.mxu0 0
        %1718 = vmatprep.subr.bf16.mxu0 0
        %1719 = vmatpush1.bf16.msra.mxu0 0
        %1720 = vmatprep.subr.bf16.mxu0 0
        %1721 = vmatpush1.bf16.msra.mxu0 0
        %1722 = vmatprep.subr.bf16.mxu0 0
        %1723 = vmatpush1.bf16.msra.mxu0 0
        %1724 = vmatprep.subr.bf16.mxu0 0
        %1725 = vmatpush1.bf16.msra.mxu0 0
        %1726 = vmatprep.subr.bf16.mxu0 0
        %1727 = vmatpush1.bf16.msra.mxu0 %v1708
        %1728 = vmatprep.subr.bf16.mxu0 0
        %1729 = vmatpush1.bf16.msra.mxu0 %v1707
        %1730 = vmatprep.subr.bf16.mxu0 0
        %1731 = vmatpush2.bf16.msra.mxu0 0
        %1732 = vmatprep.subr.bf16.mxu0 0
        %1733 = vmatpush2.bf16.msra.mxu0 0
        %1734 = vmatprep.subr.bf16.mxu0 0
        %1735 = vmatpush2.bf16.msra.mxu0 0
        %1736 = vmatprep.subr.bf16.mxu0 0
        %1737 = vmatpush2.bf16.msra.mxu0 0
        %1738 = vmatprep.subr.bf16.mxu0 0
        %1739 = vmatpush2.bf16.msra.mxu0 0
        %1740 = vmatprep.subr.bf16.mxu0 0
        %1741 = vmatpush2.bf16.msra.mxu0 0
        %1742 = vmatprep.subr.bf16.mxu0 0
        %1743 = vmatpush2.bf16.msra.mxu0 0
        %1744 = vmatprep.subr.bf16.mxu0 0
        %1745 = vmatpush2.bf16.msra.mxu0 0
        %1746 = vmatprep.mubr.bf16.mxu0 0
        %1747 = vmatmul.mubr.bf16.gmra.mxu0 %v1712
        %v1748 = vpop.f32.mrf.mxu0
        %v1749 = vadd.f32 %v1697, %v1748
        %v1750 = vpop.f32.mrf.mxu0
        %v1751 = vpop.f32.mrf.mxu0
        %v1752 = vpop.f32.mrf.mxu0
        %1753 = vdwg.mxu0
        %v1754 = vmax.f32 %v1749, 0.0
        %v1755 = vpack.c.bf16 %v1754, %v1754
        %v1756 = vld [vmem:[%s10] sm:$0xf]
        %v1757 = vld [vmem:[%s10 + $0x4] sm:$0xf]
        %v1758 = vld [vmem:[%s10 + $0x8] sm:$0xf]
        %v1759 = vld [vmem:[%s10 + $0xc] sm:$0xf]
        %v1760 = vld [vmem:[%s10 + $0x10] sm:$0xf]
        %v1761 = vld [vmem:[%s10 + $0x14] sm:$0xf]
        %v1762 = vld [vmem:[%s10 + $0x18] sm:$0xf]
        %v1763 = vld [vmem:[%s10 + $0x1c] sm:$0xf]
        %v1764 = vld [vmem:[%s10 + $0x20] sm:$0xf]
        %v1765 = vld [vmem:[%s10 + $0x24] sm:$0xf]
        %v1766 = vld [vmem:[%s10 + $0x28] sm:$0xf]
        %v1767 = vld [vmem:[%s10 + $0x2c] sm:$0xf]
        %v1768 = vld [vmem:[%s10 + $0x30] sm:$0xf]
        %v1769 = vld [vmem:[%s10 + $0x34] sm:$0xf]
        %v1770 = vld [vmem:[%s10 + $0x38] sm:$0xf]
        %v1771 = vld [vmem:[%s10 + $0x3c] sm:$0xf]
        %v1772 = vld [vmem:[%s11] sm:$0x1]
        %v1774 = vlaneseq
        %v1775 = vshrl.u32 %v1774, 7
        %v1776 = vsub.s32 0, %v1775
        %v1777 = vrot.slane %v1772, %v1776
        %v1795 = vunpack.c.l.b16 %v1756
        %v1796 = vunpack.c.l.b16 %v1757
        %v1797 = vunpack.c.l.b16 %v1758
        %v1798 = vunpack.c.l.b16 %v1759
        %v1799 = vunpack.c.l.b16 %v1760
        %v1800 = vunpack.c.l.b16 %v1761
        %v1801 = vunpack.c.l.b16 %v1762
        %v1802 = vunpack.c.l.b16 %v1763
        %v1803 = vunpack.c.l.b16 %v1764
        %v1804 = vunpack.c.l.b16 %v1765
        %v1805 = vunpack.c.l.b16 %v1766
        %v1806 = vunpack.c.l.b16 %v1767
        %v1807 = vunpack.c.l.b16 %v1768
        %v1808 = vunpack.c.l.b16 %v1769
        %v1809 = vunpack.c.l.b16 %v1770
        %v1810 = vunpack.c.l.b16 %v1771
        %v1811 = vpack.c.b16 %v1796, %v1795
        %v1812 = vpack.c.b16 %v1798, %v1797
        %v1813 = vpack.c.b16 %v1800, %v1799
        %v1814 = vpack.c.b16 %v1802, %v1801
        %v1815 = vpack.c.b16 %v1804, %v1803
        %v1816 = vpack.c.b16 %v1806, %v1805
        %v1817 = vpack.c.b16 %v1808, %v1807
        %v1818 = vpack.c.b16 %v1810, %v1809
        %1827 = vmatprep.subr.bf16.mxu0 0
        %1828 = vmatpush1.bf16.msra.mxu0 %v1818
        %1829 = vmatprep.subr.bf16.mxu0 0
        %1830 = vmatpush1.bf16.msra.mxu0 %v1817
        %1831 = vmatprep.subr.bf16.mxu0 0
        %1832 = vmatpush1.bf16.msra.mxu0 %v1816
        %1833 = vmatprep.subr.bf16.mxu0 0
        %1834 = vmatpush1.bf16.msra.mxu0 %v1815
        %1835 = vmatprep.subr.bf16.mxu0 0
        %1836 = vmatpush1.bf16.msra.mxu0 %v1814
        %1837 = vmatprep.subr.bf16.mxu0 0
        %1838 = vmatpush1.bf16.msra.mxu0 %v1813
        %1839 = vmatprep.subr.bf16.mxu0 0
        %1840 = vmatpush1.bf16.msra.mxu0 %v1812
        %1841 = vmatprep.subr.bf16.mxu0 0
        %1842 = vmatpush1.bf16.msra.mxu0 %v1811
        %1843 = vmatprep.subr.bf16.mxu0 0
        %1844 = vmatpush2.bf16.msra.mxu0 0
        %1845 = vmatprep.subr.bf16.mxu0 0
        %1846 = vmatpush2.bf16.msra.mxu0 0
        %1847 = vmatprep.subr.bf16.mxu0 0
        %1848 = vmatpush2.bf16.msra.mxu0 0
        %1849 = vmatprep.subr.bf16.mxu0 0
        %1850 = vmatpush2.bf16.msra.mxu0 0
        %1851 = vmatprep.subr.bf16.mxu0 0
        %1852 = vmatpush2.bf16.msra.mxu0 0
        %1853 = vmatprep.subr.bf16.mxu0 0
        %1854 = vmatpush2.bf16.msra.mxu0 0
        %1855 = vmatprep.subr.bf16.mxu0 0
        %1856 = vmatpush2.bf16.msra.mxu0 0
        %1857 = vmatprep.subr.bf16.mxu0 0
        %1858 = vmatpush2.bf16.msra.mxu0 0
        %1859 = vmatprep.mubr.bf16.mxu0 0
        %1860 = vmatmul.mubr.bf16.gmra.mxu0 %v1755
        %v1861 = vpop.f32.mrf.mxu0
        %v1862 = vadd.f32 %v1777, %v1861
        %v1863 = vpop.f32.mrf.mxu0
        %v1864 = vpop.f32.mrf.mxu0
        %v1865 = vpop.f32.mrf.mxu0
        %1866 = vdwg.mxu0
        %v1867 = vadd.f32 %v1657, %v1862
        %1868 = vst.msk [vmem:[%s426] sm:$0xff] %vm439, %v1867
        %s1869 = sand.u32 %s307, 1
        %s1870 = scalar_lea.sflag [#allocation6], %s1869
        %s1871 = sand.u32 %s307, 1
        %s1872 = smul.addr %s1871, 8
        %s1873 = scalar_lea.vmem [#allocation5], %s1872
        // Predicated region
        $region76: #{tpu_custom_call.1} parent=67 // pred_check
          %p1874 = pneg %p317
        $region77: #{tpu_custom_call.1} parent=67 // pred_check_branch
          %1876 = sbr.rel (%p1874) target = $region79
        $region78: #{tpu_custom_call.1} parent=67 // pred_region
          %s1878 = ssub.s32 128, 128
          %1879 = vsyncadd %s1870, %s1878
          %s1880 = sadd.s32 %s31, %s30
          %s1881 = smul.addr %s1880, 128
          %s1882 = scalar_lea.hbm %s12, %s1881
          %s1884 = sshll.u32 %s1873, 4
          %s1885 = int_to_ptr.vmem [resolvable:$true] %s1884
          %1887 = dma.vmem_to_hbm [thread:$0]  %s1885, 128, %s1882, %s1870
        $region79: #{tpu_custom_call.1} parent=67 // pred_fallthru
          _
      $region68: #{tpu_custom_call.1} parent=5 // pred_fallthru
        _
      %p1888 = scmp.le.s32.totalorder 2, %s21
      // Predicated region
      $region80: #{tpu_custom_call.1} parent=5 // pred_check
        %p1889 = pneg %p1888
      $region81: #{tpu_custom_call.1} parent=5 // pred_check_branch
        %1891 = sbr.rel (%p1889) target = $region83
      $region82: #{tpu_custom_call.1} parent=5 // pred_region
        %s1892 = ssub.s32 %s21, 2
        // Predicated region
        $region84: #{tpu_custom_call.1} parent=82 // pred_check
          %p1893 = pneg %p323
        $region85: #{tpu_custom_call.1} parent=82 // pred_check_branch
          %1895 = sbr.rel (%p1893) target = $region87
        $region86: #{tpu_custom_call.1} parent=82 // pred_region
          %s1896 = sand.u32 %s308, 1
          %s1897 = scalar_lea.sflag [#allocation6], %s1896
          %s1898 = sand.u32 %s308, 1
          %s1899 = smul.addr %s1898, 8
          %s1900 = scalar_lea.vmem [#allocation5], %s1899
          %1901 = dma.done %s1897, 128
        $region87: #{tpu_custom_call.1} parent=82 // pred_fallthru
          _
      $region83: #{tpu_custom_call.1} parent=5 // pred_fallthru
        _
    $region6: #{tpu_custom_call.1} parent=1 // loop_footer
      %s25 = sadd.s32 1, %s21
    $region7: #{tpu_custom_call.1} parent=1 // loop_footer_branch
      %20 = sbr.rel target = $region3
    $region8: #{tpu_custom_call.1} parent=1 // loop_exit
      _
    %1902 = vsyncpa [#allocation6], 1
    %s1903 = scalar_lea.sflag [#allocation6], 1
    %1904 = vsyncpa %s1903, 1

</llo_original>
